<compile_context>
chip_gen: v7x
topology: tpu7x:2x2x1
jax: 0.10.0
libtpu: 0.0.40
codegen_flags: <defaults>
</compile_context>

<pallas_src>
import functools

import jax
import jax.numpy as jnp
from jax.experimental import pallas as pl
from jax.experimental.pallas import tpu as pltpu

EMBEDDING_VECTOR_SIZE = 32
STATE_SIZE = 32
LSTM_LAYERS = 2
DROPOUT = 0.0  # nn.LSTM dropout only applies in training; this forward is inference.

_SUBLANE = 8
_LANE = 128


def _round_up(x, m):
    return (x + m - 1) // m * m


# ----------------------------------------------------------------------------
# Fused Pallas kernel: all LSTM layers + output Linear, single invocation
# ----------------------------------------------------------------------------
def _fused_lstm_kernel(num_layers, x_ref, *refs):
    """refs layout:
         [wx_0, wh_0, b_0, ..., wx_{L-1}, wh_{L-1}, b_{L-1}, w_ff, b_ff,   inputs
          logits_ref, hn_ref, cn_ref,                                      outputs
          seq_sc, gx_sc]                                                   scratch
    """
    layer_refs = refs[:3 * num_layers]
    wff_ref, bff_ref = refs[3 * num_layers:3 * num_layers + 2]
    logits_ref, hn_ref, cn_ref = refs[3 * num_layers + 2:3 * num_layers + 5]
    seq_sc, gx_sc = refs[3 * num_layers + 5:]

    _, Bp, H = hn_ref.shape
    TB = x_ref.shape[0]
    T = TB // Bp

    inp_ref = x_ref
    for l in range(num_layers):
        wx_ref, wh_ref, b_ref = layer_refs[3 * l:3 * l + 3]

        # Hoisted input projection: one (T*Bp, in) @ (in, 4H) matmul for all
        # timesteps, bias folded in.  Only h @ W_hh stays on the serial path.
        gx_sc[...] = (
            jnp.dot(inp_ref[...], wx_ref[...], preferred_element_type=jnp.float32)
            + b_ref[...])

        wh = wh_ref[...]                       # hoist weight load out of the loop
        h = jnp.zeros((Bp, H), jnp.float32)
        c = jnp.zeros((Bp, H), jnp.float32)

        # Unrolled time recurrence; Bp is a multiple of 8 so every row slice is
        # static and sublane-aligned.
        for t in range(T):
            r0 = t * Bp
            gates = gx_sc[pl.ds(r0, Bp), :] + jnp.dot(
                h, wh, preferred_element_type=jnp.float32)        # (Bp, 4H)
            i_g = jax.nn.sigmoid(gates[:, 0 * H:1 * H])
            f_g = jax.nn.sigmoid(gates[:, 1 * H:2 * H])
            g_g = jnp.tanh(gates[:, 2 * H:3 * H])
            o_g = jax.nn.sigmoid(gates[:, 3 * H:4 * H])
            c = f_g * c + i_g * g_g
            h = o_g * jnp.tanh(c)
            seq_sc[pl.ds(r0, Bp), :] = h

        # Final state written once per layer (not every step).
        hn_ref[l] = h
        cn_ref[l] = c

        # Next layer consumes this layer's full output (already in VMEM).
        # Inter-layer dropout is identity in inference.
        inp_ref = seq_sc

    # Fused output projection: one MXU matmul, single lane-dense (T*Bp, Vp) store.
    logits_ref[...] = (
        jnp.dot(seq_sc[...], wff_ref[...], preferred_element_type=jnp.float32)
        + bff_ref[...])


def _fused_forward(x_flat, layer_weights, w_ff, b_ff, *, Bp):
    TB = x_flat.shape[0]
    H = layer_weights[0][1].shape[0]          # w_hh_t is (H, 4H)
    L = len(layer_weights)
    Vp = w_ff.shape[1]

    kernel = functools.partial(_fused_lstm_kernel, L)
    flat_w = [w for trio in layer_weights for w in trio]

    out_shape = (
        jax.ShapeDtypeStruct((TB, Vp), jnp.float32),     # logits (time-major, padded)
        jax.ShapeDtypeStruct((L, Bp, H), jnp.float32),   # h_n
        jax.ShapeDtypeStruct((L, Bp, H), jnp.float32),   # c_n
    )
    return pl.pallas_call(
        kernel,
        out_shape=out_shape,
        scratch_shapes=[
            pltpu.VMEM((TB, H), jnp.float32),        # per-layer sequence output
            pltpu.VMEM((TB, 4 * H), jnp.float32),    # hoisted input-projection gates
        ],
    )(x_flat, *flat_w, w_ff, b_ff)


# ----------------------------------------------------------------------------
# Parameter init (deterministic, PyTorch-like distributions)
# ----------------------------------------------------------------------------
def init_params(vocab_size, key):
    params = {}
    n_keys = 2 + 4 * LSTM_LAYERS + 2
    keys = list(jax.random.split(key, n_keys))
    ki = iter(keys)

    # nn.Embedding default init: N(0, 1)
    params["embedding"] = jax.random.normal(
        next(ki), (vocab_size, EMBEDDING_VECTOR_SIZE), jnp.float32)
    next(ki)  # keep key budget stable

    s = 1.0 / jnp.sqrt(STATE_SIZE)
    for l in range(LSTM_LAYERS):
        in_dim = EMBEDDING_VECTOR_SIZE if l == 0 else STATE_SIZE
        w_ih = jax.random.uniform(next(ki), (4 * STATE_SIZE, in_dim),
                                  jnp.float32, -s, s)
        w_hh = jax.random.uniform(next(ki), (4 * STATE_SIZE, STATE_SIZE),
                                  jnp.float32, -s, s)
        b_ih = jax.random.uniform(next(ki), (4 * STATE_SIZE,), jnp.float32, -s, s)
        b_hh = jax.random.uniform(next(ki), (4 * STATE_SIZE,), jnp.float32, -s, s)
        params[f"w_ih_t_{l}"] = w_ih.T                       # (in_dim, 4H)
        params[f"w_hh_t_{l}"] = w_hh.T                       # (H, 4H)
        params[f"b_{l}"] = (b_ih + b_hh)[None, :]            # (1, 4H)

    s_ff = 1.0 / jnp.sqrt(STATE_SIZE)
    w_ff = jax.random.uniform(next(ki), (vocab_size, STATE_SIZE),
                              jnp.float32, -s_ff, s_ff)
    b_ff = jax.random.uniform(next(ki), (vocab_size,), jnp.float32, -s_ff, s_ff)
    params["w_ff_t"] = w_ff.T                                # (H, vocab)
    params["b_ff"] = b_ff[None, :]                           # (1, vocab)
    return params


# ----------------------------------------------------------------------------
# Full forward (mirrors LSTMNet.forward with pack_pad=False)
# ----------------------------------------------------------------------------
@jax.jit
def lstm_net_forward(params, x_tokens, seq_length):
    # x_tokens: (B, T) int32 token ids; seq_length unused when pack_pad=False.
    # TODO(synk): pack_padded_sequence path (pack_pad=True) not implemented.
    del seq_length
    B, T = x_tokens.shape
    E = EMBEDDING_VECTOR_SIZE

    # Embedding gather (plain-JAX glue), directly in time-major layout.
    x = jnp.take(params["embedding"], x_tokens.T, axis=0).astype(jnp.float32)  # (T,B,E)

    # Pad batch to a full sublane so all in-kernel row slices are 8-row aligned.
    Bp = _round_up(B, _SUBLANE)
    if Bp != B:
        x = jnp.pad(x, ((0, 0), (0, Bp - B), (0, 0)))
    x_flat = x.reshape(T * Bp, E)

    # Pad the vocab (lane) dim so the logits store is lane-dense (multiple of 128).
    V = params["b_ff"].shape[-1]
    Vp = _round_up(V, _LANE)
    w_ff, b_ff = params["w_ff_t"], params["b_ff"]
    if Vp != V:
        w_ff = jnp.pad(w_ff, ((0, 0), (0, Vp - V)))
        b_ff = jnp.pad(b_ff, ((0, 0), (0, Vp - V)))

    layer_weights = [
        (params[f"w_ih_t_{l}"], params[f"w_hh_t_{l}"], params[f"b_{l}"])
        for l in range(LSTM_LAYERS)
    ]

    logits_flat, h_n, c_n = _fused_forward(
        x_flat, layer_weights, w_ff, b_ff, Bp=Bp)

    logits = logits_flat.reshape(T, Bp, Vp)[:, :B, :V]
    logits = jnp.transpose(logits, (1, 0, 2))                 # batch_first (B, T, V)
    state = (h_n[:, :B, :], c_n[:, :B, :])                    # (L, B, H) each
    return logits, state


# ----------------------------------------------------------------------------
# Pure-JAX reference (lax.scan LSTM) for a sanity check
# ----------------------------------------------------------------------------
def reference_forward(params, x_tokens):
    emb = jnp.take(params["embedding"], x_tokens, axis=0)
    x = jnp.transpose(emb, (1, 0, 2)).astype(jnp.float32)     # (T, B, E)
    B = x.shape[1]
    H = STATE_SIZE
    h_fs, c_fs = [], []
    for l in range(LSTM_LAYERS):
        wih, whh, b = params[f"w_ih_t_{l}"], params[f"w_hh_t_{l}"], params[f"b_{l}"]

        def step(carry, x_t):
            h, c = carry
            g = x_t @ wih + h @ whh + b
            i = jax.nn.sigmoid(g[:, 0*H:1*H]); f = jax.nn.sigmoid(g[:, 1*H:2*H])
            gg = jnp.tanh(g[:, 2*H:3*H]);      o = jax.nn.sigmoid(g[:, 3*H:4*H])
            c = f * c + i * gg
            h = o * jnp.tanh(c)
            return (h, c), h

        (h_T, c_T), outs = jax.lax.scan(
            step, (jnp.zeros((B, H), jnp.float32), jnp.zeros((B, H), jnp.float32)), x)
        x = outs
        h_fs.append(h_T); c_fs.append(c_T)
    out_bth = jnp.transpose(x, (1, 0, 2))
    logits = out_bth @ params["w_ff_t"] + params["b_ff"]
    return logits, (jnp.stack(h_fs), jnp.stack(c_fs))


if __name__ == "__main__":
    VOCAB = 128
    B, T = 2, 8

    key = jax.random.PRNGKey(0)
    k_par, k_tok = jax.random.split(key)
    params = init_params(VOCAB, k_par)

    x_tokens = jax.random.randint(k_tok, (B, T), 0, VOCAB, dtype=jnp.int32)
    seq_length = jnp.full((B,), T, dtype=jnp.int32)

    (logits, (h_n, c_n)) = lstm_net_forward(params, x_tokens, seq_length)
    jax.block_until_ready((logits, h_n, c_n))

    assert logits.shape == (B, T, VOCAB)
    assert h_n.shape == (LSTM_LAYERS, B, STATE_SIZE)
    assert c_n.shape == (LSTM_LAYERS, B, STATE_SIZE)

    # sanity check vs pure-JAX reference (generous tol for MXU f32 accumulation)
    ref_logits, (ref_h, ref_c) = reference_forward(params, x_tokens)
    assert jnp.max(jnp.abs(logits - ref_logits)) < 1e-2
    assert jnp.max(jnp.abs(h_n - ref_h)) < 1e-2
    assert jnp.max(jnp.abs(c_n - ref_c)) < 1e-2

    print("KERNEL_OK")
</pallas_src>

<mosaic_0001>
module attributes {stable_mosaic.version = 11 : i64} {
  func.func @_fused_lstm_kernel(%arg0: memref<64x32xf32, #tpu.memory_space<vmem>>, %arg1: memref<32x128xf32, #tpu.memory_space<vmem>>, %arg2: memref<32x128xf32, #tpu.memory_space<vmem>>, %arg3: memref<1x128xf32, #tpu.memory_space<vmem>>, %arg4: memref<32x128xf32, #tpu.memory_space<vmem>>, %arg5: memref<32x128xf32, #tpu.memory_space<vmem>>, %arg6: memref<1x128xf32, #tpu.memory_space<vmem>>, %arg7: memref<32x128xf32, #tpu.memory_space<vmem>>, %arg8: memref<1x128xf32, #tpu.memory_space<vmem>>, %arg9: memref<64x128xf32, #tpu.memory_space<vmem>>, %arg10: memref<2x8x32xf32, #tpu.memory_space<vmem>>, %arg11: memref<2x8x32xf32, #tpu.memory_space<vmem>>, %arg12: memref<64x32xf32, #tpu.memory_space<vmem>>, %arg13: memref<64x128xf32, #tpu.memory_space<vmem>>) attributes {dimension_semantics = [], scalar_prefetch = 0 : i64, scratch_operands = 2 : i64, tpu.core_type = #tpu.core_type<tc>} {
    %c0 = arith.constant 0 : index
    %c0_0 = arith.constant 0 : index
    %0 = vector.load %arg0[%c0, %c0_0] : memref<64x32xf32, #tpu.memory_space<vmem>>, vector<64x32xf32>
    %c0_1 = arith.constant 0 : index
    %c0_2 = arith.constant 0 : index
    %1 = vector.load %arg1[%c0_1, %c0_2] : memref<32x128xf32, #tpu.memory_space<vmem>>, vector<32x128xf32>
    %cst = arith.constant dense<0.000000e+00> : vector<64x128xf32>
    %2 = tpu.matmul %0, %1, %cst {dimension_numbers = #tpu.dot_dimension_numbers<[1], [0], [0], [1], [0, 0, 1, 1], [], []>} : vector<64x32xf32>, vector<32x128xf32>, vector<64x128xf32> -> vector<64x128xf32>
    %c0_3 = arith.constant 0 : index
    %c0_4 = arith.constant 0 : index
    %3 = vector.load %arg3[%c0_3, %c0_4] : memref<1x128xf32, #tpu.memory_space<vmem>>, vector<1x128xf32>
    %4 = vector.broadcast %3 : vector<1x128xf32> to vector<64x128xf32>
    %5 = arith.addf %2, %4 : vector<64x128xf32>
    %c0_5 = arith.constant 0 : index
    %c0_6 = arith.constant 0 : index
    %6 = vector.load %arg13[%c0_5, %c0_6] : memref<64x128xf32, #tpu.memory_space<vmem>>, vector<64x128xf32>
    tpu.vector_store %arg13[%c0_5, %c0_6], %5 {strides = array<i32>} : memref<64x128xf32, #tpu.memory_space<vmem>>, vector<64x128xf32>,
    %c0_7 = arith.constant 0 : index
    %c0_8 = arith.constant 0 : index
    %7 = vector.load %arg2[%c0_7, %c0_8] : memref<32x128xf32, #tpu.memory_space<vmem>>, vector<32x128xf32>
    %cst_9 = arith.constant 0.000000e+00 : f32
    %8 = vector.broadcast %cst_9 : f32 to vector<8x32xf32>
    %cst_10 = arith.constant 0.000000e+00 : f32
    %9 = vector.broadcast %cst_10 : f32 to vector<8x32xf32>
    %c0_11 = arith.constant 0 : index
    %c0_12 = arith.constant 0 : index
    %10 = vector.load %arg13[%c0_11, %c0_12] : memref<64x128xf32, #tpu.memory_space<vmem>>, vector<8x128xf32>
    %cst_13 = arith.constant dense<0.000000e+00> : vector<8x128xf32>
    %11 = tpu.matmul %8, %7, %cst_13 {dimension_numbers = #tpu.dot_dimension_numbers<[1], [0], [0], [1], [0, 0, 1, 1], [], []>} : vector<8x32xf32>, vector<32x128xf32>, vector<8x128xf32> -> vector<8x128xf32>
    %12 = arith.addf %10, %11 : vector<8x128xf32>
    %13 = vector.extract_strided_slice %12 {offsets = [0, 0], sizes = [8, 32], strides = [1, 1]} : vector<8x128xf32> to vector<8x32xf32>
    %14 = arith.negf %13 : vector<8x32xf32>
    %15 = math.exp %14 : vector<8x32xf32>
    %cst_14 = arith.constant 1.000000e+00 : f32
    %16 = vector.broadcast %cst_14 : f32 to vector<8x32xf32>
    %17 = arith.addf %16, %15 : vector<8x32xf32>
    %18 = arith.divf %16, %17 : vector<8x32xf32>
    %19 = vector.extract_strided_slice %12 {offsets = [0, 32], sizes = [8, 32], strides = [1, 1]} : vector<8x128xf32> to vector<8x32xf32>
    %20 = arith.negf %19 : vector<8x32xf32>
    %21 = math.exp %20 : vector<8x32xf32>
    %cst_15 = arith.constant 1.000000e+00 : f32
    %22 = vector.broadcast %cst_15 : f32 to vector<8x32xf32>
    %23 = arith.addf %22, %21 : vector<8x32xf32>
    %24 = arith.divf %22, %23 : vector<8x32xf32>
    %25 = vector.extract_strided_slice %12 {offsets = [0, 64], sizes = [8, 32], strides = [1, 1]} : vector<8x128xf32> to vector<8x32xf32>
    %26 = math.tanh %25 : vector<8x32xf32>
    %27 = vector.extract_strided_slice %12 {offsets = [0, 96], sizes = [8, 32], strides = [1, 1]} : vector<8x128xf32> to vector<8x32xf32>
    %28 = arith.negf %27 : vector<8x32xf32>
    %29 = math.exp %28 : vector<8x32xf32>
    %cst_16 = arith.constant 1.000000e+00 : f32
    %30 = vector.broadcast %cst_16 : f32 to vector<8x32xf32>
    %31 = arith.addf %30, %29 : vector<8x32xf32>
    %32 = arith.divf %30, %31 : vector<8x32xf32>
    %33 = arith.mulf %24, %9 : vector<8x32xf32>
    %34 = arith.mulf %18, %26 : vector<8x32xf32>
    %35 = arith.addf %33, %34 : vector<8x32xf32>
    %36 = math.tanh %35 : vector<8x32xf32>
    %37 = arith.mulf %32, %36 : vector<8x32xf32>
    %c0_17 = arith.constant 0 : index
    %c0_18 = arith.constant 0 : index
    %38 = vector.load %arg12[%c0_17, %c0_18] : memref<64x32xf32, #tpu.memory_space<vmem>>, vector<8x32xf32>
    tpu.vector_store %arg12[%c0_17, %c0_18], %37 {strides = array<i32>} : memref<64x32xf32, #tpu.memory_space<vmem>>, vector<8x32xf32>,
    %c8 = arith.constant 8 : index
    %c0_19 = arith.constant 0 : index
    %39 = vector.load %arg13[%c8, %c0_19] : memref<64x128xf32, #tpu.memory_space<vmem>>, vector<8x128xf32>
    %cst_20 = arith.constant dense<0.000000e+00> : vector<8x128xf32>
    %40 = tpu.matmul %37, %7, %cst_20 {dimension_numbers = #tpu.dot_dimension_numbers<[1], [0], [0], [1], [0, 0, 1, 1], [], []>} : vector<8x32xf32>, vector<32x128xf32>, vector<8x128xf32> -> vector<8x128xf32>
    %41 = arith.addf %39, %40 : vector<8x128xf32>
    %42 = vector.extract_strided_slice %41 {offsets = [0, 0], sizes = [8, 32], strides = [1, 1]} : vector<8x128xf32> to vector<8x32xf32>
    %43 = arith.negf %42 : vector<8x32xf32>
    %44 = math.exp %43 : vector<8x32xf32>
    %cst_21 = arith.constant 1.000000e+00 : f32
    %45 = vector.broadcast %cst_21 : f32 to vector<8x32xf32>
    %46 = arith.addf %45, %44 : vector<8x32xf32>
    %47 = arith.divf %45, %46 : vector<8x32xf32>
    %48 = vector.extract_strided_slice %41 {offsets = [0, 32], sizes = [8, 32], strides = [1, 1]} : vector<8x128xf32> to vector<8x32xf32>
    %49 = arith.negf %48 : vector<8x32xf32>
    %50 = math.exp %49 : vector<8x32xf32>
    %cst_22 = arith.constant 1.000000e+00 : f32
    %51 = vector.broadcast %cst_22 : f32 to vector<8x32xf32>
    %52 = arith.addf %51, %50 : vector<8x32xf32>
    %53 = arith.divf %51, %52 : vector<8x32xf32>
    %54 = vector.extract_strided_slice %41 {offsets = [0, 64], sizes = [8, 32], strides = [1, 1]} : vector<8x128xf32> to vector<8x32xf32>
    %55 = math.tanh %54 : vector<8x32xf32>
    %56 = vector.extract_strided_slice %41 {offsets = [0, 96], sizes = [8, 32], strides = [1, 1]} : vector<8x128xf32> to vector<8x32xf32>
    %57 = arith.negf %56 : vector<8x32xf32>
    %58 = math.exp %57 : vector<8x32xf32>
    %cst_23 = arith.constant 1.000000e+00 : f32
    %59 = vector.broadcast %cst_23 : f32 to vector<8x32xf32>
    %60 = arith.addf %59, %58 : vector<8x32xf32>
    %61 = arith.divf %59, %60 : vector<8x32xf32>
    %62 = arith.mulf %53, %35 : vector<8x32xf32>
    %63 = arith.mulf %47, %55 : vector<8x32xf32>
    %64 = arith.addf %62, %63 : vector<8x32xf32>
    %65 = math.tanh %64 : vector<8x32xf32>
    %66 = arith.mulf %61, %65 : vector<8x32xf32>
    %c8_24 = arith.constant 8 : index
    %c0_25 = arith.constant 0 : index
    %67 = vector.load %arg12[%c8_24, %c0_25] : memref<64x32xf32, #tpu.memory_space<vmem>>, vector<8x32xf32>
    tpu.vector_store %arg12[%c8_24, %c0_25], %66 {strides = array<i32>} : memref<64x32xf32, #tpu.memory_space<vmem>>, vector<8x32xf32>,
    %c16 = arith.constant 16 : index
    %c0_26 = arith.constant 0 : index
    %68 = vector.load %arg13[%c16, %c0_26] : memref<64x128xf32, #tpu.memory_space<vmem>>, vector<8x128xf32>
    %cst_27 = arith.constant dense<0.000000e+00> : vector<8x128xf32>
    %69 = tpu.matmul %66, %7, %cst_27 {dimension_numbers = #tpu.dot_dimension_numbers<[1], [0], [0], [1], [0, 0, 1, 1], [], []>} : vector<8x32xf32>, vector<32x128xf32>, vector<8x128xf32> -> vector<8x128xf32>
    %70 = arith.addf %68, %69 : vector<8x128xf32>
    %71 = vector.extract_strided_slice %70 {offsets = [0, 0], sizes = [8, 32], strides = [1, 1]} : vector<8x128xf32> to vector<8x32xf32>
    %72 = arith.negf %71 : vector<8x32xf32>
    %73 = math.exp %72 : vector<8x32xf32>
    %cst_28 = arith.constant 1.000000e+00 : f32
    %74 = vector.broadcast %cst_28 : f32 to vector<8x32xf32>
    %75 = arith.addf %74, %73 : vector<8x32xf32>
    %76 = arith.divf %74, %75 : vector<8x32xf32>
    %77 = vector.extract_strided_slice %70 {offsets = [0, 32], sizes = [8, 32], strides = [1, 1]} : vector<8x128xf32> to vector<8x32xf32>
    %78 = arith.negf %77 : vector<8x32xf32>
    %79 = math.exp %78 : vector<8x32xf32>
    %cst_29 = arith.constant 1.000000e+00 : f32
    %80 = vector.broadcast %cst_29 : f32 to vector<8x32xf32>
    %81 = arith.addf %80, %79 : vector<8x32xf32>
    %82 = arith.divf %80, %81 : vector<8x32xf32>
    %83 = vector.extract_strided_slice %70 {offsets = [0, 64], sizes = [8, 32], strides = [1, 1]} : vector<8x128xf32> to vector<8x32xf32>
    %84 = math.tanh %83 : vector<8x32xf32>
    %85 = vector.extract_strided_slice %70 {offsets = [0, 96], sizes = [8, 32], strides = [1, 1]} : vector<8x128xf32> to vector<8x32xf32>
    %86 = arith.negf %85 : vector<8x32xf32>
    %87 = math.exp %86 : vector<8x32xf32>
    %cst_30 = arith.constant 1.000000e+00 : f32
    %88 = vector.broadcast %cst_30 : f32 to vector<8x32xf32>
    %89 = arith.addf %88, %87 : vector<8x32xf32>
    %90 = arith.divf %88, %89 : vector<8x32xf32>
    %91 = arith.mulf %82, %64 : vector<8x32xf32>
    %92 = arith.mulf %76, %84 : vector<8x32xf32>
    %93 = arith.addf %91, %92 : vector<8x32xf32>
    %94 = math.tanh %93 : vector<8x32xf32>
    %95 = arith.mulf %90, %94 : vector<8x32xf32>
    %c16_31 = arith.constant 16 : index
    %c0_32 = arith.constant 0 : index
    %96 = vector.load %arg12[%c16_31, %c0_32] : memref<64x32xf32, #tpu.memory_space<vmem>>, vector<8x32xf32>
    tpu.vector_store %arg12[%c16_31, %c0_32], %95 {strides = array<i32>} : memref<64x32xf32, #tpu.memory_space<vmem>>, vector<8x32xf32>,
    %c24 = arith.constant 24 : index
    %c0_33 = arith.constant 0 : index
    %97 = vector.load %arg13[%c24, %c0_33] : memref<64x128xf32, #tpu.memory_space<vmem>>, vector<8x128xf32>
    %cst_34 = arith.constant dense<0.000000e+00> : vector<8x128xf32>
    %98 = tpu.matmul %95, %7, %cst_34 {dimension_numbers = #tpu.dot_dimension_numbers<[1], [0], [0], [1], [0, 0, 1, 1], [], []>} : vector<8x32xf32>, vector<32x128xf32>, vector<8x128xf32> -> vector<8x128xf32>
    %99 = arith.addf %97, %98 : vector<8x128xf32>
    %100 = vector.extract_strided_slice %99 {offsets = [0, 0], sizes = [8, 32], strides = [1, 1]} : vector<8x128xf32> to vector<8x32xf32>
    %101 = arith.negf %100 : vector<8x32xf32>
    %102 = math.exp %101 : vector<8x32xf32>
    %cst_35 = arith.constant 1.000000e+00 : f32
    %103 = vector.broadcast %cst_35 : f32 to vector<8x32xf32>
    %104 = arith.addf %103, %102 : vector<8x32xf32>
    %105 = arith.divf %103, %104 : vector<8x32xf32>
    %106 = vector.extract_strided_slice %99 {offsets = [0, 32], sizes = [8, 32], strides = [1, 1]} : vector<8x128xf32> to vector<8x32xf32>
    %107 = arith.negf %106 : vector<8x32xf32>
    %108 = math.exp %107 : vector<8x32xf32>
    %cst_36 = arith.constant 1.000000e+00 : f32
    %109 = vector.broadcast %cst_36 : f32 to vector<8x32xf32>
    %110 = arith.addf %109, %108 : vector<8x32xf32>
    %111 = arith.divf %109, %110 : vector<8x32xf32>
    %112 = vector.extract_strided_slice %99 {offsets = [0, 64], sizes = [8, 32], strides = [1, 1]} : vector<8x128xf32> to vector<8x32xf32>
    %113 = math.tanh %112 : vector<8x32xf32>
    %114 = vector.extract_strided_slice %99 {offsets = [0, 96], sizes = [8, 32], strides = [1, 1]} : vector<8x128xf32> to vector<8x32xf32>
    %115 = arith.negf %114 : vector<8x32xf32>
    %116 = math.exp %115 : vector<8x32xf32>
    %cst_37 = arith.constant 1.000000e+00 : f32
    %117 = vector.broadcast %cst_37 : f32 to vector<8x32xf32>
    %118 = arith.addf %117, %116 : vector<8x32xf32>
    %119 = arith.divf %117, %118 : vector<8x32xf32>
    %120 = arith.mulf %111, %93 : vector<8x32xf32>
    %121 = arith.mulf %105, %113 : vector<8x32xf32>
    %122 = arith.addf %120, %121 : vector<8x32xf32>
    %123 = math.tanh %122 : vector<8x32xf32>
    %124 = arith.mulf %119, %123 : vector<8x32xf32>
    %c24_38 = arith.constant 24 : index
    %c0_39 = arith.constant 0 : index
    %125 = vector.load %arg12[%c24_38, %c0_39] : memref<64x32xf32, #tpu.memory_space<vmem>>, vector<8x32xf32>
    tpu.vector_store %arg12[%c24_38, %c0_39], %124 {strides = array<i32>} : memref<64x32xf32, #tpu.memory_space<vmem>>, vector<8x32xf32>,
    %c32 = arith.constant 32 : index
    %c0_40 = arith.constant 0 : index
    %126 = vector.load %arg13[%c32, %c0_40] : memref<64x128xf32, #tpu.memory_space<vmem>>, vector<8x128xf32>
    %cst_41 = arith.constant dense<0.000000e+00> : vector<8x128xf32>
    %127 = tpu.matmul %124, %7, %cst_41 {dimension_numbers = #tpu.dot_dimension_numbers<[1], [0], [0], [1], [0, 0, 1, 1], [], []>} : vector<8x32xf32>, vector<32x128xf32>, vector<8x128xf32> -> vector<8x128xf32>
    %128 = arith.addf %126, %127 : vector<8x128xf32>
    %129 = vector.extract_strided_slice %128 {offsets = [0, 0], sizes = [8, 32], strides = [1, 1]} : vector<8x128xf32> to vector<8x32xf32>
    %130 = arith.negf %129 : vector<8x32xf32>
    %131 = math.exp %130 : vector<8x32xf32>
    %cst_42 = arith.constant 1.000000e+00 : f32
    %132 = vector.broadcast %cst_42 : f32 to vector<8x32xf32>
    %133 = arith.addf %132, %131 : vector<8x32xf32>
    %134 = arith.divf %132, %133 : vector<8x32xf32>
    %135 = vector.extract_strided_slice %128 {offsets = [0, 32], sizes = [8, 32], strides = [1, 1]} : vector<8x128xf32> to vector<8x32xf32>
    %136 = arith.negf %135 : vector<8x32xf32>
    %137 = math.exp %136 : vector<8x32xf32>
    %cst_43 = arith.constant 1.000000e+00 : f32
    %138 = vector.broadcast %cst_43 : f32 to vector<8x32xf32>
    %139 = arith.addf %138, %137 : vector<8x32xf32>
    %140 = arith.divf %138, %139 : vector<8x32xf32>
    %141 = vector.extract_strided_slice %128 {offsets = [0, 64], sizes = [8, 32], strides = [1, 1]} : vector<8x128xf32> to vector<8x32xf32>
    %142 = math.tanh %141 : vector<8x32xf32>
    %143 = vector.extract_strided_slice %128 {offsets = [0, 96], sizes = [8, 32], strides = [1, 1]} : vector<8x128xf32> to vector<8x32xf32>
    %144 = arith.negf %143 : vector<8x32xf32>
    %145 = math.exp %144 : vector<8x32xf32>
    %cst_44 = arith.constant 1.000000e+00 : f32
    %146 = vector.broadcast %cst_44 : f32 to vector<8x32xf32>
    %147 = arith.addf %146, %145 : vector<8x32xf32>
    %148 = arith.divf %146, %147 : vector<8x32xf32>
    %149 = arith.mulf %140, %122 : vector<8x32xf32>
    %150 = arith.mulf %134, %142 : vector<8x32xf32>
    %151 = arith.addf %149, %150 : vector<8x32xf32>
    %152 = math.tanh %151 : vector<8x32xf32>
    %153 = arith.mulf %148, %152 : vector<8x32xf32>
    %c32_45 = arith.constant 32 : index
    %c0_46 = arith.constant 0 : index
    %154 = vector.load %arg12[%c32_45, %c0_46] : memref<64x32xf32, #tpu.memory_space<vmem>>, vector<8x32xf32>
    tpu.vector_store %arg12[%c32_45, %c0_46], %153 {strides = array<i32>} : memref<64x32xf32, #tpu.memory_space<vmem>>, vector<8x32xf32>,
    %c40 = arith.constant 40 : index
    %c0_47 = arith.constant 0 : index
    %155 = vector.load %arg13[%c40, %c0_47] : memref<64x128xf32, #tpu.memory_space<vmem>>, vector<8x128xf32>
    %cst_48 = arith.constant dense<0.000000e+00> : vector<8x128xf32>
    %156 = tpu.matmul %153, %7, %cst_48 {dimension_numbers = #tpu.dot_dimension_numbers<[1], [0], [0], [1], [0, 0, 1, 1], [], []>} : vector<8x32xf32>, vector<32x128xf32>, vector<8x128xf32> -> vector<8x128xf32>
    %157 = arith.addf %155, %156 : vector<8x128xf32>
    %158 = vector.extract_strided_slice %157 {offsets = [0, 0], sizes = [8, 32], strides = [1, 1]} : vector<8x128xf32> to vector<8x32xf32>
    %159 = arith.negf %158 : vector<8x32xf32>
    %160 = math.exp %159 : vector<8x32xf32>
    %cst_49 = arith.constant 1.000000e+00 : f32
    %161 = vector.broadcast %cst_49 : f32 to vector<8x32xf32>
    %162 = arith.addf %161, %160 : vector<8x32xf32>
    %163 = arith.divf %161, %162 : vector<8x32xf32>
    %164 = vector.extract_strided_slice %157 {offsets = [0, 32], sizes = [8, 32], strides = [1, 1]} : vector<8x128xf32> to vector<8x32xf32>
    %165 = arith.negf %164 : vector<8x32xf32>
    %166 = math.exp %165 : vector<8x32xf32>
    %cst_50 = arith.constant 1.000000e+00 : f32
    %167 = vector.broadcast %cst_50 : f32 to vector<8x32xf32>
    %168 = arith.addf %167, %166 : vector<8x32xf32>
    %169 = arith.divf %167, %168 : vector<8x32xf32>
    %170 = vector.extract_strided_slice %157 {offsets = [0, 64], sizes = [8, 32], strides = [1, 1]} : vector<8x128xf32> to vector<8x32xf32>
    %171 = math.tanh %170 : vector<8x32xf32>
    %172 = vector.extract_strided_slice %157 {offsets = [0, 96], sizes = [8, 32], strides = [1, 1]} : vector<8x128xf32> to vector<8x32xf32>
    %173 = arith.negf %172 : vector<8x32xf32>
    %174 = math.exp %173 : vector<8x32xf32>
    %cst_51 = arith.constant 1.000000e+00 : f32
    %175 = vector.broadcast %cst_51 : f32 to vector<8x32xf32>
    %176 = arith.addf %175, %174 : vector<8x32xf32>
    %177 = arith.divf %175, %176 : vector<8x32xf32>
    %178 = arith.mulf %169, %151 : vector<8x32xf32>
    %179 = arith.mulf %163, %171 : vector<8x32xf32>
    %180 = arith.addf %178, %179 : vector<8x32xf32>
    %181 = math.tanh %180 : vector<8x32xf32>
    %182 = arith.mulf %177, %181 : vector<8x32xf32>
    %c40_52 = arith.constant 40 : index
    %c0_53 = arith.constant 0 : index
    %183 = vector.load %arg12[%c40_52, %c0_53] : memref<64x32xf32, #tpu.memory_space<vmem>>, vector<8x32xf32>
    tpu.vector_store %arg12[%c40_52, %c0_53], %182 {strides = array<i32>} : memref<64x32xf32, #tpu.memory_space<vmem>>, vector<8x32xf32>,
    %c48 = arith.constant 48 : index
    %c0_54 = arith.constant 0 : index
    %184 = vector.load %arg13[%c48, %c0_54] : memref<64x128xf32, #tpu.memory_space<vmem>>, vector<8x128xf32>
    %cst_55 = arith.constant dense<0.000000e+00> : vector<8x128xf32>
    %185 = tpu.matmul %182, %7, %cst_55 {dimension_numbers = #tpu.dot_dimension_numbers<[1], [0], [0], [1], [0, 0, 1, 1], [], []>} : vector<8x32xf32>, vector<32x128xf32>, vector<8x128xf32> -> vector<8x128xf32>
    %186 = arith.addf %184, %185 : vector<8x128xf32>
    %187 = vector.extract_strided_slice %186 {offsets = [0, 0], sizes = [8, 32], strides = [1, 1]} : vector<8x128xf32> to vector<8x32xf32>
    %188 = arith.negf %187 : vector<8x32xf32>
    %189 = math.exp %188 : vector<8x32xf32>
    %cst_56 = arith.constant 1.000000e+00 : f32
    %190 = vector.broadcast %cst_56 : f32 to vector<8x32xf32>
    %191 = arith.addf %190, %189 : vector<8x32xf32>
    %192 = arith.divf %190, %191 : vector<8x32xf32>
    %193 = vector.extract_strided_slice %186 {offsets = [0, 32], sizes = [8, 32], strides = [1, 1]} : vector<8x128xf32> to vector<8x32xf32>
    %194 = arith.negf %193 : vector<8x32xf32>
    %195 = math.exp %194 : vector<8x32xf32>
    %cst_57 = arith.constant 1.000000e+00 : f32
    %196 = vector.broadcast %cst_57 : f32 to vector<8x32xf32>
    %197 = arith.addf %196, %195 : vector<8x32xf32>
    %198 = arith.divf %196, %197 : vector<8x32xf32>
    %199 = vector.extract_strided_slice %186 {offsets = [0, 64], sizes = [8, 32], strides = [1, 1]} : vector<8x128xf32> to vector<8x32xf32>
    %200 = math.tanh %199 : vector<8x32xf32>
    %201 = vector.extract_strided_slice %186 {offsets = [0, 96], sizes = [8, 32], strides = [1, 1]} : vector<8x128xf32> to vector<8x32xf32>
    %202 = arith.negf %201 : vector<8x32xf32>
    %203 = math.exp %202 : vector<8x32xf32>
    %cst_58 = arith.constant 1.000000e+00 : f32
    %204 = vector.broadcast %cst_58 : f32 to vector<8x32xf32>
    %205 = arith.addf %204, %203 : vector<8x32xf32>
    %206 = arith.divf %204, %205 : vector<8x32xf32>
    %207 = arith.mulf %198, %180 : vector<8x32xf32>
    %208 = arith.mulf %192, %200 : vector<8x32xf32>
    %209 = arith.addf %207, %208 : vector<8x32xf32>
    %210 = math.tanh %209 : vector<8x32xf32>
    %211 = arith.mulf %206, %210 : vector<8x32xf32>
    %c48_59 = arith.constant 48 : index
    %c0_60 = arith.constant 0 : index
    %212 = vector.load %arg12[%c48_59, %c0_60] : memref<64x32xf32, #tpu.memory_space<vmem>>, vector<8x32xf32>
    tpu.vector_store %arg12[%c48_59, %c0_60], %211 {strides = array<i32>} : memref<64x32xf32, #tpu.memory_space<vmem>>, vector<8x32xf32>,
    %c56 = arith.constant 56 : index
    %c0_61 = arith.constant 0 : index
    %213 = vector.load %arg13[%c56, %c0_61] : memref<64x128xf32, #tpu.memory_space<vmem>>, vector<8x128xf32>
    %cst_62 = arith.constant dense<0.000000e+00> : vector<8x128xf32>
    %214 = tpu.matmul %211, %7, %cst_62 {dimension_numbers = #tpu.dot_dimension_numbers<[1], [0], [0], [1], [0, 0, 1, 1], [], []>} : vector<8x32xf32>, vector<32x128xf32>, vector<8x128xf32> -> vector<8x128xf32>
    %215 = arith.addf %213, %214 : vector<8x128xf32>
    %216 = vector.extract_strided_slice %215 {offsets = [0, 0], sizes = [8, 32], strides = [1, 1]} : vector<8x128xf32> to vector<8x32xf32>
    %217 = arith.negf %216 : vector<8x32xf32>
    %218 = math.exp %217 : vector<8x32xf32>
    %cst_63 = arith.constant 1.000000e+00 : f32
    %219 = vector.broadcast %cst_63 : f32 to vector<8x32xf32>
    %220 = arith.addf %219, %218 : vector<8x32xf32>
    %221 = arith.divf %219, %220 : vector<8x32xf32>
    %222 = vector.extract_strided_slice %215 {offsets = [0, 32], sizes = [8, 32], strides = [1, 1]} : vector<8x128xf32> to vector<8x32xf32>
    %223 = arith.negf %222 : vector<8x32xf32>
    %224 = math.exp %223 : vector<8x32xf32>
    %cst_64 = arith.constant 1.000000e+00 : f32
    %225 = vector.broadcast %cst_64 : f32 to vector<8x32xf32>
    %226 = arith.addf %225, %224 : vector<8x32xf32>
    %227 = arith.divf %225, %226 : vector<8x32xf32>
    %228 = vector.extract_strided_slice %215 {offsets = [0, 64], sizes = [8, 32], strides = [1, 1]} : vector<8x128xf32> to vector<8x32xf32>
    %229 = math.tanh %228 : vector<8x32xf32>
    %230 = vector.extract_strided_slice %215 {offsets = [0, 96], sizes = [8, 32], strides = [1, 1]} : vector<8x128xf32> to vector<8x32xf32>
    %231 = arith.negf %230 : vector<8x32xf32>
    %232 = math.exp %231 : vector<8x32xf32>
    %cst_65 = arith.constant 1.000000e+00 : f32
    %233 = vector.broadcast %cst_65 : f32 to vector<8x32xf32>
    %234 = arith.addf %233, %232 : vector<8x32xf32>
    %235 = arith.divf %233, %234 : vector<8x32xf32>
    %236 = arith.mulf %227, %209 : vector<8x32xf32>
    %237 = arith.mulf %221, %229 : vector<8x32xf32>
    %238 = arith.addf %236, %237 : vector<8x32xf32>
    %239 = math.tanh %238 : vector<8x32xf32>
    %240 = arith.mulf %235, %239 : vector<8x32xf32>
    %c56_66 = arith.constant 56 : index
    %c0_67 = arith.constant 0 : index
    %241 = vector.load %arg12[%c56_66, %c0_67] : memref<64x32xf32, #tpu.memory_space<vmem>>, vector<8x32xf32>
    tpu.vector_store %arg12[%c56_66, %c0_67], %240 {strides = array<i32>} : memref<64x32xf32, #tpu.memory_space<vmem>>, vector<8x32xf32>,
    %c0_68 = arith.constant 0 : index
    %c0_69 = arith.constant 0 : index
    %c0_70 = arith.constant 0 : index
    %242 = vector.load %arg10[%c0_68, %c0_69, %c0_70] : memref<2x8x32xf32, #tpu.memory_space<vmem>>, vector<1x8x32xf32>
    %243 = vector.shape_cast %242 : vector<1x8x32xf32> to vector<8x32xf32>
    %244 = vector.shape_cast %240 : vector<8x32xf32> to vector<1x8x32xf32>
    tpu.vector_store %arg10[%c0_68, %c0_69, %c0_70], %244 {strides = array<i32>} : memref<2x8x32xf32, #tpu.memory_space<vmem>>, vector<1x8x32xf32>,
    %c0_71 = arith.constant 0 : index
    %c0_72 = arith.constant 0 : index
    %c0_73 = arith.constant 0 : index
    %245 = vector.load %arg11[%c0_71, %c0_72, %c0_73] : memref<2x8x32xf32, #tpu.memory_space<vmem>>, vector<1x8x32xf32>
    %246 = vector.shape_cast %245 : vector<1x8x32xf32> to vector<8x32xf32>
    %247 = vector.shape_cast %238 : vector<8x32xf32> to vector<1x8x32xf32>
    tpu.vector_store %arg11[%c0_71, %c0_72, %c0_73], %247 {strides = array<i32>} : memref<2x8x32xf32, #tpu.memory_space<vmem>>, vector<1x8x32xf32>,
    %c0_74 = arith.constant 0 : index
    %c0_75 = arith.constant 0 : index
    %248 = vector.load %arg12[%c0_74, %c0_75] : memref<64x32xf32, #tpu.memory_space<vmem>>, vector<64x32xf32>
    %c0_76 = arith.constant 0 : index
    %c0_77 = arith.constant 0 : index
    %249 = vector.load %arg4[%c0_76, %c0_77] : memref<32x128xf32, #tpu.memory_space<vmem>>, vector<32x128xf32>
    %cst_78 = arith.constant dense<0.000000e+00> : vector<64x128xf32>
    %250 = tpu.matmul %248, %249, %cst_78 {dimension_numbers = #tpu.dot_dimension_numbers<[1], [0], [0], [1], [0, 0, 1, 1], [], []>} : vector<64x32xf32>, vector<32x128xf32>, vector<64x128xf32> -> vector<64x128xf32>
    %c0_79 = arith.constant 0 : index
    %c0_80 = arith.constant 0 : index
    %251 = vector.load %arg6[%c0_79, %c0_80] : memref<1x128xf32, #tpu.memory_space<vmem>>, vector<1x128xf32>
    %252 = vector.broadcast %251 : vector<1x128xf32> to vector<64x128xf32>
    %253 = arith.addf %250, %252 : vector<64x128xf32>
    %c0_81 = arith.constant 0 : index
    %c0_82 = arith.constant 0 : index
    %254 = vector.load %arg13[%c0_81, %c0_82] : memref<64x128xf32, #tpu.memory_space<vmem>>, vector<64x128xf32>
    tpu.vector_store %arg13[%c0_81, %c0_82], %253 {strides = array<i32>} : memref<64x128xf32, #tpu.memory_space<vmem>>, vector<64x128xf32>,
    %c0_83 = arith.constant 0 : index
    %c0_84 = arith.constant 0 : index
    %255 = vector.load %arg5[%c0_83, %c0_84] : memref<32x128xf32, #tpu.memory_space<vmem>>, vector<32x128xf32>
    %cst_85 = arith.constant 0.000000e+00 : f32
    %256 = vector.broadcast %cst_85 : f32 to vector<8x32xf32>
    %cst_86 = arith.constant 0.000000e+00 : f32
    %257 = vector.broadcast %cst_86 : f32 to vector<8x32xf32>
    %c0_87 = arith.constant 0 : index
    %c0_88 = arith.constant 0 : index
    %258 = vector.load %arg13[%c0_87, %c0_88] : memref<64x128xf32, #tpu.memory_space<vmem>>, vector<8x128xf32>
    %cst_89 = arith.constant dense<0.000000e+00> : vector<8x128xf32>
    %259 = tpu.matmul %256, %255, %cst_89 {dimension_numbers = #tpu.dot_dimension_numbers<[1], [0], [0], [1], [0, 0, 1, 1], [], []>} : vector<8x32xf32>, vector<32x128xf32>, vector<8x128xf32> -> vector<8x128xf32>
    %260 = arith.addf %258, %259 : vector<8x128xf32>
    %261 = vector.extract_strided_slice %260 {offsets = [0, 0], sizes = [8, 32], strides = [1, 1]} : vector<8x128xf32> to vector<8x32xf32>
    %262 = arith.negf %261 : vector<8x32xf32>
    %263 = math.exp %262 : vector<8x32xf32>
    %cst_90 = arith.constant 1.000000e+00 : f32
    %264 = vector.broadcast %cst_90 : f32 to vector<8x32xf32>
    %265 = arith.addf %264, %263 : vector<8x32xf32>
    %266 = arith.divf %264, %265 : vector<8x32xf32>
    %267 = vector.extract_strided_slice %260 {offsets = [0, 32], sizes = [8, 32], strides = [1, 1]} : vector<8x128xf32> to vector<8x32xf32>
    %268 = arith.negf %267 : vector<8x32xf32>
    %269 = math.exp %268 : vector<8x32xf32>
    %cst_91 = arith.constant 1.000000e+00 : f32
    %270 = vector.broadcast %cst_91 : f32 to vector<8x32xf32>
    %271 = arith.addf %270, %269 : vector<8x32xf32>
    %272 = arith.divf %270, %271 : vector<8x32xf32>
    %273 = vector.extract_strided_slice %260 {offsets = [0, 64], sizes = [8, 32], strides = [1, 1]} : vector<8x128xf32> to vector<8x32xf32>
    %274 = math.tanh %273 : vector<8x32xf32>
    %275 = vector.extract_strided_slice %260 {offsets = [0, 96], sizes = [8, 32], strides = [1, 1]} : vector<8x128xf32> to vector<8x32xf32>
    %276 = arith.negf %275 : vector<8x32xf32>
    %277 = math.exp %276 : vector<8x32xf32>
    %cst_92 = arith.constant 1.000000e+00 : f32
    %278 = vector.broadcast %cst_92 : f32 to vector<8x32xf32>
    %279 = arith.addf %278, %277 : vector<8x32xf32>
    %280 = arith.divf %278, %279 : vector<8x32xf32>
    %281 = arith.mulf %272, %257 : vector<8x32xf32>
    %282 = arith.mulf %266, %274 : vector<8x32xf32>
    %283 = arith.addf %281, %282 : vector<8x32xf32>
    %284 = math.tanh %283 : vector<8x32xf32>
    %285 = arith.mulf %280, %284 : vector<8x32xf32>
    %c0_93 = arith.constant 0 : index
    %c0_94 = arith.constant 0 : index
    %286 = vector.load %arg12[%c0_93, %c0_94] : memref<64x32xf32, #tpu.memory_space<vmem>>, vector<8x32xf32>
    tpu.vector_store %arg12[%c0_93, %c0_94], %285 {strides = array<i32>} : memref<64x32xf32, #tpu.memory_space<vmem>>, vector<8x32xf32>,
    %c8_95 = arith.constant 8 : index
    %c0_96 = arith.constant 0 : index
    %287 = vector.load %arg13[%c8_95, %c0_96] : memref<64x128xf32, #tpu.memory_space<vmem>>, vector<8x128xf32>
    %cst_97 = arith.constant dense<0.000000e+00> : vector<8x128xf32>
    %288 = tpu.matmul %285, %255, %cst_97 {dimension_numbers = #tpu.dot_dimension_numbers<[1], [0], [0], [1], [0, 0, 1, 1], [], []>} : vector<8x32xf32>, vector<32x128xf32>, vector<8x128xf32> -> vector<8x128xf32>
    %289 = arith.addf %287, %288 : vector<8x128xf32>
    %290 = vector.extract_strided_slice %289 {offsets = [0, 0], sizes = [8, 32], strides = [1, 1]} : vector<8x128xf32> to vector<8x32xf32>
    %291 = arith.negf %290 : vector<8x32xf32>
    %292 = math.exp %291 : vector<8x32xf32>
    %cst_98 = arith.constant 1.000000e+00 : f32
    %293 = vector.broadcast %cst_98 : f32 to vector<8x32xf32>
    %294 = arith.addf %293, %292 : vector<8x32xf32>
    %295 = arith.divf %293, %294 : vector<8x32xf32>
    %296 = vector.extract_strided_slice %289 {offsets = [0, 32], sizes = [8, 32], strides = [1, 1]} : vector<8x128xf32> to vector<8x32xf32>
    %297 = arith.negf %296 : vector<8x32xf32>
    %298 = math.exp %297 : vector<8x32xf32>
    %cst_99 = arith.constant 1.000000e+00 : f32
    %299 = vector.broadcast %cst_99 : f32 to vector<8x32xf32>
    %300 = arith.addf %299, %298 : vector<8x32xf32>
    %301 = arith.divf %299, %300 : vector<8x32xf32>
    %302 = vector.extract_strided_slice %289 {offsets = [0, 64], sizes = [8, 32], strides = [1, 1]} : vector<8x128xf32> to vector<8x32xf32>
    %303 = math.tanh %302 : vector<8x32xf32>
    %304 = vector.extract_strided_slice %289 {offsets = [0, 96], sizes = [8, 32], strides = [1, 1]} : vector<8x128xf32> to vector<8x32xf32>
    %305 = arith.negf %304 : vector<8x32xf32>
    %306 = math.exp %305 : vector<8x32xf32>
    %cst_100 = arith.constant 1.000000e+00 : f32
    %307 = vector.broadcast %cst_100 : f32 to vector<8x32xf32>
    %308 = arith.addf %307, %306 : vector<8x32xf32>
    %309 = arith.divf %307, %308 : vector<8x32xf32>
    %310 = arith.mulf %301, %283 : vector<8x32xf32>
    %311 = arith.mulf %295, %303 : vector<8x32xf32>
    %312 = arith.addf %310, %311 : vector<8x32xf32>
    %313 = math.tanh %312 : vector<8x32xf32>
    %314 = arith.mulf %309, %313 : vector<8x32xf32>
    %c8_101 = arith.constant 8 : index
    %c0_102 = arith.constant 0 : index
    %315 = vector.load %arg12[%c8_101, %c0_102] : memref<64x32xf32, #tpu.memory_space<vmem>>, vector<8x32xf32>
    tpu.vector_store %arg12[%c8_101, %c0_102], %314 {strides = array<i32>} : memref<64x32xf32, #tpu.memory_space<vmem>>, vector<8x32xf32>,
    %c16_103 = arith.constant 16 : index
    %c0_104 = arith.constant 0 : index
    %316 = vector.load %arg13[%c16_103, %c0_104] : memref<64x128xf32, #tpu.memory_space<vmem>>, vector<8x128xf32>
    %cst_105 = arith.constant dense<0.000000e+00> : vector<8x128xf32>
    %317 = tpu.matmul %314, %255, %cst_105 {dimension_numbers = #tpu.dot_dimension_numbers<[1], [0], [0], [1], [0, 0, 1, 1], [], []>} : vector<8x32xf32>, vector<32x128xf32>, vector<8x128xf32> -> vector<8x128xf32>
    %318 = arith.addf %316, %317 : vector<8x128xf32>
    %319 = vector.extract_strided_slice %318 {offsets = [0, 0], sizes = [8, 32], strides = [1, 1]} : vector<8x128xf32> to vector<8x32xf32>
    %320 = arith.negf %319 : vector<8x32xf32>
    %321 = math.exp %320 : vector<8x32xf32>
    %cst_106 = arith.constant 1.000000e+00 : f32
    %322 = vector.broadcast %cst_106 : f32 to vector<8x32xf32>
    %323 = arith.addf %322, %321 : vector<8x32xf32>
    %324 = arith.divf %322, %323 : vector<8x32xf32>
    %325 = vector.extract_strided_slice %318 {offsets = [0, 32], sizes = [8, 32], strides = [1, 1]} : vector<8x128xf32> to vector<8x32xf32>
    %326 = arith.negf %325 : vector<8x32xf32>
    %327 = math.exp %326 : vector<8x32xf32>
    %cst_107 = arith.constant 1.000000e+00 : f32
    %328 = vector.broadcast %cst_107 : f32 to vector<8x32xf32>
    %329 = arith.addf %328, %327 : vector<8x32xf32>
    %330 = arith.divf %328, %329 : vector<8x32xf32>
    %331 = vector.extract_strided_slice %318 {offsets = [0, 64], sizes = [8, 32], strides = [1, 1]} : vector<8x128xf32> to vector<8x32xf32>
    %332 = math.tanh %331 : vector<8x32xf32>
    %333 = vector.extract_strided_slice %318 {offsets = [0, 96], sizes = [8, 32], strides = [1, 1]} : vector<8x128xf32> to vector<8x32xf32>
    %334 = arith.negf %333 : vector<8x32xf32>
    %335 = math.exp %334 : vector<8x32xf32>
    %cst_108 = arith.constant 1.000000e+00 : f32
    %336 = vector.broadcast %cst_108 : f32 to vector<8x32xf32>
    %337 = arith.addf %336, %335 : vector<8x32xf32>
    %338 = arith.divf %336, %337 : vector<8x32xf32>
    %339 = arith.mulf %330, %312 : vector<8x32xf32>
    %340 = arith.mulf %324, %332 : vector<8x32xf32>
    %341 = arith.addf %339, %340 : vector<8x32xf32>
    %342 = math.tanh %341 : vector<8x32xf32>
    %343 = arith.mulf %338, %342 : vector<8x32xf32>
    %c16_109 = arith.constant 16 : index
    %c0_110 = arith.constant 0 : index
    %344 = vector.load %arg12[%c16_109, %c0_110] : memref<64x32xf32, #tpu.memory_space<vmem>>, vector<8x32xf32>
    tpu.vector_store %arg12[%c16_109, %c0_110], %343 {strides = array<i32>} : memref<64x32xf32, #tpu.memory_space<vmem>>, vector<8x32xf32>,
    %c24_111 = arith.constant 24 : index
    %c0_112 = arith.constant 0 : index
    %345 = vector.load %arg13[%c24_111, %c0_112] : memref<64x128xf32, #tpu.memory_space<vmem>>, vector<8x128xf32>
    %cst_113 = arith.constant dense<0.000000e+00> : vector<8x128xf32>
    %346 = tpu.matmul %343, %255, %cst_113 {dimension_numbers = #tpu.dot_dimension_numbers<[1], [0], [0], [1], [0, 0, 1, 1], [], []>} : vector<8x32xf32>, vector<32x128xf32>, vector<8x128xf32> -> vector<8x128xf32>
    %347 = arith.addf %345, %346 : vector<8x128xf32>
    %348 = vector.extract_strided_slice %347 {offsets = [0, 0], sizes = [8, 32], strides = [1, 1]} : vector<8x128xf32> to vector<8x32xf32>
    %349 = arith.negf %348 : vector<8x32xf32>
    %350 = math.exp %349 : vector<8x32xf32>
    %cst_114 = arith.constant 1.000000e+00 : f32
    %351 = vector.broadcast %cst_114 : f32 to vector<8x32xf32>
    %352 = arith.addf %351, %350 : vector<8x32xf32>
    %353 = arith.divf %351, %352 : vector<8x32xf32>
    %354 = vector.extract_strided_slice %347 {offsets = [0, 32], sizes = [8, 32], strides = [1, 1]} : vector<8x128xf32> to vector<8x32xf32>
    %355 = arith.negf %354 : vector<8x32xf32>
    %356 = math.exp %355 : vector<8x32xf32>
    %cst_115 = arith.constant 1.000000e+00 : f32
    %357 = vector.broadcast %cst_115 : f32 to vector<8x32xf32>
    %358 = arith.addf %357, %356 : vector<8x32xf32>
    %359 = arith.divf %357, %358 : vector<8x32xf32>
    %360 = vector.extract_strided_slice %347 {offsets = [0, 64], sizes = [8, 32], strides = [1, 1]} : vector<8x128xf32> to vector<8x32xf32>
    %361 = math.tanh %360 : vector<8x32xf32>
    %362 = vector.extract_strided_slice %347 {offsets = [0, 96], sizes = [8, 32], strides = [1, 1]} : vector<8x128xf32> to vector<8x32xf32>
    %363 = arith.negf %362 : vector<8x32xf32>
    %364 = math.exp %363 : vector<8x32xf32>
    %cst_116 = arith.constant 1.000000e+00 : f32
    %365 = vector.broadcast %cst_116 : f32 to vector<8x32xf32>
    %366 = arith.addf %365, %364 : vector<8x32xf32>
    %367 = arith.divf %365, %366 : vector<8x32xf32>
    %368 = arith.mulf %359, %341 : vector<8x32xf32>
    %369 = arith.mulf %353, %361 : vector<8x32xf32>
    %370 = arith.addf %368, %369 : vector<8x32xf32>
    %371 = math.tanh %370 : vector<8x32xf32>
    %372 = arith.mulf %367, %371 : vector<8x32xf32>
    %c24_117 = arith.constant 24 : index
    %c0_118 = arith.constant 0 : index
    %373 = vector.load %arg12[%c24_117, %c0_118] : memref<64x32xf32, #tpu.memory_space<vmem>>, vector<8x32xf32>
    tpu.vector_store %arg12[%c24_117, %c0_118], %372 {strides = array<i32>} : memref<64x32xf32, #tpu.memory_space<vmem>>, vector<8x32xf32>,
    %c32_119 = arith.constant 32 : index
    %c0_120 = arith.constant 0 : index
    %374 = vector.load %arg13[%c32_119, %c0_120] : memref<64x128xf32, #tpu.memory_space<vmem>>, vector<8x128xf32>
    %cst_121 = arith.constant dense<0.000000e+00> : vector<8x128xf32>
    %375 = tpu.matmul %372, %255, %cst_121 {dimension_numbers = #tpu.dot_dimension_numbers<[1], [0], [0], [1], [0, 0, 1, 1], [], []>} : vector<8x32xf32>, vector<32x128xf32>, vector<8x128xf32> -> vector<8x128xf32>
    %376 = arith.addf %374, %375 : vector<8x128xf32>
    %377 = vector.extract_strided_slice %376 {offsets = [0, 0], sizes = [8, 32], strides = [1, 1]} : vector<8x128xf32> to vector<8x32xf32>
    %378 = arith.negf %377 : vector<8x32xf32>
    %379 = math.exp %378 : vector<8x32xf32>
    %cst_122 = arith.constant 1.000000e+00 : f32
    %380 = vector.broadcast %cst_122 : f32 to vector<8x32xf32>
    %381 = arith.addf %380, %379 : vector<8x32xf32>
    %382 = arith.divf %380, %381 : vector<8x32xf32>
    %383 = vector.extract_strided_slice %376 {offsets = [0, 32], sizes = [8, 32], strides = [1, 1]} : vector<8x128xf32> to vector<8x32xf32>
    %384 = arith.negf %383 : vector<8x32xf32>
    %385 = math.exp %384 : vector<8x32xf32>
    %cst_123 = arith.constant 1.000000e+00 : f32
    %386 = vector.broadcast %cst_123 : f32 to vector<8x32xf32>
    %387 = arith.addf %386, %385 : vector<8x32xf32>
    %388 = arith.divf %386, %387 : vector<8x32xf32>
    %389 = vector.extract_strided_slice %376 {offsets = [0, 64], sizes = [8, 32], strides = [1, 1]} : vector<8x128xf32> to vector<8x32xf32>
    %390 = math.tanh %389 : vector<8x32xf32>
    %391 = vector.extract_strided_slice %376 {offsets = [0, 96], sizes = [8, 32], strides = [1, 1]} : vector<8x128xf32> to vector<8x32xf32>
    %392 = arith.negf %391 : vector<8x32xf32>
    %393 = math.exp %392 : vector<8x32xf32>
    %cst_124 = arith.constant 1.000000e+00 : f32
    %394 = vector.broadcast %cst_124 : f32 to vector<8x32xf32>
    %395 = arith.addf %394, %393 : vector<8x32xf32>
    %396 = arith.divf %394, %395 : vector<8x32xf32>
    %397 = arith.mulf %388, %370 : vector<8x32xf32>
    %398 = arith.mulf %382, %390 : vector<8x32xf32>
    %399 = arith.addf %397, %398 : vector<8x32xf32>
    %400 = math.tanh %399 : vector<8x32xf32>
    %401 = arith.mulf %396, %400 : vector<8x32xf32>
    %c32_125 = arith.constant 32 : index
    %c0_126 = arith.constant 0 : index
    %402 = vector.load %arg12[%c32_125, %c0_126] : memref<64x32xf32, #tpu.memory_space<vmem>>, vector<8x32xf32>
    tpu.vector_store %arg12[%c32_125, %c0_126], %401 {strides = array<i32>} : memref<64x32xf32, #tpu.memory_space<vmem>>, vector<8x32xf32>,
    %c40_127 = arith.constant 40 : index
    %c0_128 = arith.constant 0 : index
    %403 = vector.load %arg13[%c40_127, %c0_128] : memref<64x128xf32, #tpu.memory_space<vmem>>, vector<8x128xf32>
    %cst_129 = arith.constant dense<0.000000e+00> : vector<8x128xf32>
    %404 = tpu.matmul %401, %255, %cst_129 {dimension_numbers = #tpu.dot_dimension_numbers<[1], [0], [0], [1], [0, 0, 1, 1], [], []>} : vector<8x32xf32>, vector<32x128xf32>, vector<8x128xf32> -> vector<8x128xf32>
    %405 = arith.addf %403, %404 : vector<8x128xf32>
    %406 = vector.extract_strided_slice %405 {offsets = [0, 0], sizes = [8, 32], strides = [1, 1]} : vector<8x128xf32> to vector<8x32xf32>
    %407 = arith.negf %406 : vector<8x32xf32>
    %408 = math.exp %407 : vector<8x32xf32>
    %cst_130 = arith.constant 1.000000e+00 : f32
    %409 = vector.broadcast %cst_130 : f32 to vector<8x32xf32>
    %410 = arith.addf %409, %408 : vector<8x32xf32>
    %411 = arith.divf %409, %410 : vector<8x32xf32>
    %412 = vector.extract_strided_slice %405 {offsets = [0, 32], sizes = [8, 32], strides = [1, 1]} : vector<8x128xf32> to vector<8x32xf32>
    %413 = arith.negf %412 : vector<8x32xf32>
    %414 = math.exp %413 : vector<8x32xf32>
    %cst_131 = arith.constant 1.000000e+00 : f32
    %415 = vector.broadcast %cst_131 : f32 to vector<8x32xf32>
    %416 = arith.addf %415, %414 : vector<8x32xf32>
    %417 = arith.divf %415, %416 : vector<8x32xf32>
    %418 = vector.extract_strided_slice %405 {offsets = [0, 64], sizes = [8, 32], strides = [1, 1]} : vector<8x128xf32> to vector<8x32xf32>
    %419 = math.tanh %418 : vector<8x32xf32>
    %420 = vector.extract_strided_slice %405 {offsets = [0, 96], sizes = [8, 32], strides = [1, 1]} : vector<8x128xf32> to vector<8x32xf32>
    %421 = arith.negf %420 : vector<8x32xf32>
    %422 = math.exp %421 : vector<8x32xf32>
    %cst_132 = arith.constant 1.000000e+00 : f32
    %423 = vector.broadcast %cst_132 : f32 to vector<8x32xf32>
    %424 = arith.addf %423, %422 : vector<8x32xf32>
    %425 = arith.divf %423, %424 : vector<8x32xf32>
    %426 = arith.mulf %417, %399 : vector<8x32xf32>
    %427 = arith.mulf %411, %419 : vector<8x32xf32>
    %428 = arith.addf %426, %427 : vector<8x32xf32>
    %429 = math.tanh %428 : vector<8x32xf32>
    %430 = arith.mulf %425, %429 : vector<8x32xf32>
    %c40_133 = arith.constant 40 : index
    %c0_134 = arith.constant 0 : index
    %431 = vector.load %arg12[%c40_133, %c0_134] : memref<64x32xf32, #tpu.memory_space<vmem>>, vector<8x32xf32>
    tpu.vector_store %arg12[%c40_133, %c0_134], %430 {strides = array<i32>} : memref<64x32xf32, #tpu.memory_space<vmem>>, vector<8x32xf32>,
    %c48_135 = arith.constant 48 : index
    %c0_136 = arith.constant 0 : index
    %432 = vector.load %arg13[%c48_135, %c0_136] : memref<64x128xf32, #tpu.memory_space<vmem>>, vector<8x128xf32>
    %cst_137 = arith.constant dense<0.000000e+00> : vector<8x128xf32>
    %433 = tpu.matmul %430, %255, %cst_137 {dimension_numbers = #tpu.dot_dimension_numbers<[1], [0], [0], [1], [0, 0, 1, 1], [], []>} : vector<8x32xf32>, vector<32x128xf32>, vector<8x128xf32> -> vector<8x128xf32>
    %434 = arith.addf %432, %433 : vector<8x128xf32>
    %435 = vector.extract_strided_slice %434 {offsets = [0, 0], sizes = [8, 32], strides = [1, 1]} : vector<8x128xf32> to vector<8x32xf32>
    %436 = arith.negf %435 : vector<8x32xf32>
    %437 = math.exp %436 : vector<8x32xf32>
    %cst_138 = arith.constant 1.000000e+00 : f32
    %438 = vector.broadcast %cst_138 : f32 to vector<8x32xf32>
    %439 = arith.addf %438, %437 : vector<8x32xf32>
    %440 = arith.divf %438, %439 : vector<8x32xf32>
    %441 = vector.extract_strided_slice %434 {offsets = [0, 32], sizes = [8, 32], strides = [1, 1]} : vector<8x128xf32> to vector<8x32xf32>
    %442 = arith.negf %441 : vector<8x32xf32>
    %443 = math.exp %442 : vector<8x32xf32>
    %cst_139 = arith.constant 1.000000e+00 : f32
    %444 = vector.broadcast %cst_139 : f32 to vector<8x32xf32>
    %445 = arith.addf %444, %443 : vector<8x32xf32>
    %446 = arith.divf %444, %445 : vector<8x32xf32>
    %447 = vector.extract_strided_slice %434 {offsets = [0, 64], sizes = [8, 32], strides = [1, 1]} : vector<8x128xf32> to vector<8x32xf32>
    %448 = math.tanh %447 : vector<8x32xf32>
    %449 = vector.extract_strided_slice %434 {offsets = [0, 96], sizes = [8, 32], strides = [1, 1]} : vector<8x128xf32> to vector<8x32xf32>
    %450 = arith.negf %449 : vector<8x32xf32>
    %451 = math.exp %450 : vector<8x32xf32>
    %cst_140 = arith.constant 1.000000e+00 : f32
    %452 = vector.broadcast %cst_140 : f32 to vector<8x32xf32>
    %453 = arith.addf %452, %451 : vector<8x32xf32>
    %454 = arith.divf %452, %453 : vector<8x32xf32>
    %455 = arith.mulf %446, %428 : vector<8x32xf32>
    %456 = arith.mulf %440, %448 : vector<8x32xf32>
    %457 = arith.addf %455, %456 : vector<8x32xf32>
    %458 = math.tanh %457 : vector<8x32xf32>
    %459 = arith.mulf %454, %458 : vector<8x32xf32>
    %c48_141 = arith.constant 48 : index
    %c0_142 = arith.constant 0 : index
    %460 = vector.load %arg12[%c48_141, %c0_142] : memref<64x32xf32, #tpu.memory_space<vmem>>, vector<8x32xf32>
    tpu.vector_store %arg12[%c48_141, %c0_142], %459 {strides = array<i32>} : memref<64x32xf32, #tpu.memory_space<vmem>>, vector<8x32xf32>,
    %c56_143 = arith.constant 56 : index
    %c0_144 = arith.constant 0 : index
    %461 = vector.load %arg13[%c56_143, %c0_144] : memref<64x128xf32, #tpu.memory_space<vmem>>, vector<8x128xf32>
    %cst_145 = arith.constant dense<0.000000e+00> : vector<8x128xf32>
    %462 = tpu.matmul %459, %255, %cst_145 {dimension_numbers = #tpu.dot_dimension_numbers<[1], [0], [0], [1], [0, 0, 1, 1], [], []>} : vector<8x32xf32>, vector<32x128xf32>, vector<8x128xf32> -> vector<8x128xf32>
    %463 = arith.addf %461, %462 : vector<8x128xf32>
    %464 = vector.extract_strided_slice %463 {offsets = [0, 0], sizes = [8, 32], strides = [1, 1]} : vector<8x128xf32> to vector<8x32xf32>
    %465 = arith.negf %464 : vector<8x32xf32>
    %466 = math.exp %465 : vector<8x32xf32>
    %cst_146 = arith.constant 1.000000e+00 : f32
    %467 = vector.broadcast %cst_146 : f32 to vector<8x32xf32>
    %468 = arith.addf %467, %466 : vector<8x32xf32>
    %469 = arith.divf %467, %468 : vector<8x32xf32>
    %470 = vector.extract_strided_slice %463 {offsets = [0, 32], sizes = [8, 32], strides = [1, 1]} : vector<8x128xf32> to vector<8x32xf32>
    %471 = arith.negf %470 : vector<8x32xf32>
    %472 = math.exp %471 : vector<8x32xf32>
    %cst_147 = arith.constant 1.000000e+00 : f32
    %473 = vector.broadcast %cst_147 : f32 to vector<8x32xf32>
    %474 = arith.addf %473, %472 : vector<8x32xf32>
    %475 = arith.divf %473, %474 : vector<8x32xf32>
    %476 = vector.extract_strided_slice %463 {offsets = [0, 64], sizes = [8, 32], strides = [1, 1]} : vector<8x128xf32> to vector<8x32xf32>
    %477 = math.tanh %476 : vector<8x32xf32>
    %478 = vector.extract_strided_slice %463 {offsets = [0, 96], sizes = [8, 32], strides = [1, 1]} : vector<8x128xf32> to vector<8x32xf32>
    %479 = arith.negf %478 : vector<8x32xf32>
    %480 = math.exp %479 : vector<8x32xf32>
    %cst_148 = arith.constant 1.000000e+00 : f32
    %481 = vector.broadcast %cst_148 : f32 to vector<8x32xf32>
    %482 = arith.addf %481, %480 : vector<8x32xf32>
    %483 = arith.divf %481, %482 : vector<8x32xf32>
    %484 = arith.mulf %475, %457 : vector<8x32xf32>
    %485 = arith.mulf %469, %477 : vector<8x32xf32>
    %486 = arith.addf %484, %485 : vector<8x32xf32>
    %487 = math.tanh %486 : vector<8x32xf32>
    %488 = arith.mulf %483, %487 : vector<8x32xf32>
    %c56_149 = arith.constant 56 : index
    %c0_150 = arith.constant 0 : index
    %489 = vector.load %arg12[%c56_149, %c0_150] : memref<64x32xf32, #tpu.memory_space<vmem>>, vector<8x32xf32>
    tpu.vector_store %arg12[%c56_149, %c0_150], %488 {strides = array<i32>} : memref<64x32xf32, #tpu.memory_space<vmem>>, vector<8x32xf32>,
    %c1 = arith.constant 1 : index
    %c0_151 = arith.constant 0 : index
    %c0_152 = arith.constant 0 : index
    %490 = vector.load %arg10[%c1, %c0_151, %c0_152] : memref<2x8x32xf32, #tpu.memory_space<vmem>>, vector<1x8x32xf32>
    %491 = vector.shape_cast %490 : vector<1x8x32xf32> to vector<8x32xf32>
    %492 = vector.shape_cast %488 : vector<8x32xf32> to vector<1x8x32xf32>
    tpu.vector_store %arg10[%c1, %c0_151, %c0_152], %492 {strides = array<i32>} : memref<2x8x32xf32, #tpu.memory_space<vmem>>, vector<1x8x32xf32>,
    %c1_153 = arith.constant 1 : index
    %c0_154 = arith.constant 0 : index
    %c0_155 = arith.constant 0 : index
    %493 = vector.load %arg11[%c1_153, %c0_154, %c0_155] : memref<2x8x32xf32, #tpu.memory_space<vmem>>, vector<1x8x32xf32>
    %494 = vector.shape_cast %493 : vector<1x8x32xf32> to vector<8x32xf32>
    %495 = vector.shape_cast %486 : vector<8x32xf32> to vector<1x8x32xf32>
    tpu.vector_store %arg11[%c1_153, %c0_154, %c0_155], %495 {strides = array<i32>} : memref<2x8x32xf32, #tpu.memory_space<vmem>>, vector<1x8x32xf32>,
    %c0_156 = arith.constant 0 : index
    %c0_157 = arith.constant 0 : index
    %496 = vector.load %arg12[%c0_156, %c0_157] : memref<64x32xf32, #tpu.memory_space<vmem>>, vector<64x32xf32>
    %c0_158 = arith.constant 0 : index
    %c0_159 = arith.constant 0 : index
    %497 = vector.load %arg7[%c0_158, %c0_159] : memref<32x128xf32, #tpu.memory_space<vmem>>, vector<32x128xf32>
    %cst_160 = arith.constant dense<0.000000e+00> : vector<64x128xf32>
    %498 = tpu.matmul %496, %497, %cst_160 {dimension_numbers = #tpu.dot_dimension_numbers<[1], [0], [0], [1], [0, 0, 1, 1], [], []>} : vector<64x32xf32>, vector<32x128xf32>, vector<64x128xf32> -> vector<64x128xf32>
    %c0_161 = arith.constant 0 : index
    %c0_162 = arith.constant 0 : index
    %499 = vector.load %arg8[%c0_161, %c0_162] : memref<1x128xf32, #tpu.memory_space<vmem>>, vector<1x128xf32>
    %500 = vector.broadcast %499 : vector<1x128xf32> to vector<64x128xf32>
    %501 = arith.addf %498, %500 : vector<64x128xf32>
    %c0_163 = arith.constant 0 : index
    %c0_164 = arith.constant 0 : index
    %502 = vector.load %arg9[%c0_163, %c0_164] : memref<64x128xf32, #tpu.memory_space<vmem>>, vector<64x128xf32>
    tpu.vector_store %arg9[%c0_163, %c0_164], %501 {strides = array<i32>} : memref<64x128xf32, #tpu.memory_space<vmem>>, vector<64x128xf32>,
    return
  }
}

</mosaic_0001>

<llo_original>
// kernel: lstm_net_forward.1
$region0: #{lstm_net_forward.1}
  #allocation0 [shape = 'u32[]', space=smem, size = 0x4, offset = 0x4, fixed_abs, tag = 'smem constant byte address 0x4 - core index']
  #allocation1 [shape = 'u32[144,128]{1,0:T(1,128)}', space=vmem, size = 0x12000, scoped, tag = 'internal scratch']
  #allocation2 [shape = 'f32[64,32]{1,0:T(8,128)}', space=vmem, size = 0x8000, scoped, tag = 'scratch operand']
  #allocation3 [shape = 'f32[64,128]{1,0:T(8,128)}', space=vmem, size = 0x8000, scoped, tag = 'scratch operand']
  %s0 = inlined_call_operand.vmem [shape: f32[64,32], index: 0, kind: input, shape index: {}]
  %s1 = inlined_call_operand.vmem [shape: f32[32,128], index: 1, kind: input, shape index: {}]
  %s2 = inlined_call_operand.vmem [shape: f32[32,128], index: 2, kind: input, shape index: {}]
  %s3 = inlined_call_operand.vmem [shape: f32[1,128], index: 3, kind: input, shape index: {}]
  %s4 = inlined_call_operand.vmem [shape: f32[32,128], index: 4, kind: input, shape index: {}]
  %s5 = inlined_call_operand.vmem [shape: f32[32,128], index: 5, kind: input, shape index: {}]
  %s6 = inlined_call_operand.vmem [shape: f32[1,128], index: 6, kind: input, shape index: {}]
  %s7 = inlined_call_operand.vmem [shape: f32[32,128], index: 7, kind: input, shape index: {}]
  %s8 = inlined_call_operand.vmem [shape: f32[1,128], index: 8, kind: input, shape index: {}]
  %s9 = inlined_call_operand.vmem [shape: f32[64,128], index: 9, kind: output, shape index: {0}]
  %s10 = inlined_call_operand.vmem [shape: f32[2,8,32], index: 10, kind: output, shape index: {1}]
  %s11 = inlined_call_operand.vmem [shape: f32[2,8,32], index: 11, kind: output, shape index: {2}]
  %12 = xla_tuple %s9, %s10, %s11
  %s13 = sld [smem:[#allocation0]]
  $region62: #{lstm_net_forward.1} parent=0
    _
  %s15 = ssub.s32 1, %s13
  %s16 = scalar_select 0, %s15, %s13
  // Predicated region
  $region2: #{lstm_net_forward.1} parent=0 // pred_check
    _
  $region3: #{lstm_net_forward.1} parent=0 // pred_check_branch
    %18 = sbr.rel (0) target = $region5
  $region4: #{lstm_net_forward.1} parent=0 // pred_region
    _
  $region5: #{lstm_net_forward.1} parent=0 // pred_fallthru
    _
  // Predicated region
  $region6: #{lstm_net_forward.1} parent=0 // pred_check
    _
  $region7: #{lstm_net_forward.1} parent=0 // pred_check_branch
    %20 = sbr.rel (0) target = $region9
  $region8: #{lstm_net_forward.1} parent=0 // pred_region
    _
  $region9: #{lstm_net_forward.1} parent=0 // pred_fallthru
    _
  // Predicated region
  $region10: #{lstm_net_forward.1} parent=0 // pred_check
    _
  $region11: #{lstm_net_forward.1} parent=0 // pred_check_branch
    %22 = sbr.rel (0) target = $region13
  $region12: #{lstm_net_forward.1} parent=0 // pred_region
    _
  $region13: #{lstm_net_forward.1} parent=0 // pred_fallthru
    _
  // Predicated region
  $region14: #{lstm_net_forward.1} parent=0 // pred_check
    _
  $region15: #{lstm_net_forward.1} parent=0 // pred_check_branch
    %24 = sbr.rel (0) target = $region17
  $region16: #{lstm_net_forward.1} parent=0 // pred_region
    _
  $region17: #{lstm_net_forward.1} parent=0 // pred_fallthru
    _
  // Predicated region
  $region18: #{lstm_net_forward.1} parent=0 // pred_check
    _
  $region19: #{lstm_net_forward.1} parent=0 // pred_check_branch
    %26 = sbr.rel (0) target = $region21
  $region20: #{lstm_net_forward.1} parent=0 // pred_region
    _
  $region21: #{lstm_net_forward.1} parent=0 // pred_fallthru
    _
  // Predicated region
  $region22: #{lstm_net_forward.1} parent=0 // pred_check
    _
  $region23: #{lstm_net_forward.1} parent=0 // pred_check_branch
    %28 = sbr.rel (0) target = $region25
  $region24: #{lstm_net_forward.1} parent=0 // pred_region
    _
  $region25: #{lstm_net_forward.1} parent=0 // pred_fallthru
    _
  // Predicated region
  $region26: #{lstm_net_forward.1} parent=0 // pred_check
    _
  $region27: #{lstm_net_forward.1} parent=0 // pred_check_branch
    %30 = sbr.rel (0) target = $region29
  $region28: #{lstm_net_forward.1} parent=0 // pred_region
    _
  $region29: #{lstm_net_forward.1} parent=0 // pred_fallthru
    _
  // Predicated region
  $region30: #{lstm_net_forward.1} parent=0 // pred_check
    _
  $region31: #{lstm_net_forward.1} parent=0 // pred_check_branch
    %32 = sbr.rel (0) target = $region33
  $region32: #{lstm_net_forward.1} parent=0 // pred_region
    _
  $region33: #{lstm_net_forward.1} parent=0 // pred_fallthru
    _
  // Predicated region
  $region34: #{lstm_net_forward.1} parent=0 // pred_check
    _
  $region35: #{lstm_net_forward.1} parent=0 // pred_check_branch
    %34 = sbr.rel (0) target = $region37
  $region36: #{lstm_net_forward.1} parent=0 // pred_region
    _
  $region37: #{lstm_net_forward.1} parent=0 // pred_fallthru
    _
  %v35 = vld [vmem:[%s0] sm:$0xff]
  %v36 = vld [vmem:[%s0 + $0x8] sm:$0xff]
  %v37 = vld [vmem:[%s0 + $0x10] sm:$0xff]
  %v38 = vld [vmem:[%s0 + $0x18] sm:$0xff]
  %v39 = vld [vmem:[%s0 + $0x20] sm:$0xff]
  %v40 = vld [vmem:[%s0 + $0x28] sm:$0xff]
  %v41 = vld [vmem:[%s0 + $0x30] sm:$0xff]
  %v42 = vld [vmem:[%s0 + $0x38] sm:$0xff]
  %v43 = vld [vmem:[%s1] sm:$0xff]
  %v44 = vld [vmem:[%s1 + $0x8] sm:$0xff]
  %v45 = vld [vmem:[%s1 + $0x10] sm:$0xff]
  %v46 = vld [vmem:[%s1 + $0x18] sm:$0xff]
  %v47 = vld [vmem:[%s3] sm:$0x1]
  %v49 = vlaneseq
  %v50 = vshrl.u32 %v49, 7
  %v51 = vsub.s32 0, %v50
  %v52 = vrot.slane %v47, %v51
  %vm54 = vcmask 261120
  %v56 = vsel %vm54, %v35, 0
  %v59 = vsel %vm54, %v36, 0
  %v62 = vsel %vm54, %v37, 0
  %v65 = vsel %vm54, %v38, 0
  %v68 = vsel %vm54, %v39, 0
  %v71 = vsel %vm54, %v40, 0
  %v74 = vsel %vm54, %v41, 0
  %v77 = vsel %vm54, %v42, 0
  %79 = vmatprep.subr.mxu0 0.0
  %80 = vmatpush1.msra.mxu0 %v43
  %81 = vmatprep.subr.mxu0 0.0
  %82 = vmatpush1.msra.mxu0 %v44
  %83 = vmatprep.subr.mxu0 0.0
  %84 = vmatpush1.msra.mxu0 %v45
  %85 = vmatprep.subr.mxu0 0.0
  %86 = vmatpush1.msra.mxu0 %v46
  %87 = vmatprep.subr.mxu0 0.0
  %88 = vmatpush1.msra.mxu0 0.0
  %89 = vmatprep.subr.mxu0 0.0
  %90 = vmatpush1.msra.mxu0 0.0
  %91 = vmatprep.subr.mxu0 0.0
  %92 = vmatpush1.msra.mxu0 0.0
  %93 = vmatprep.subr.mxu0 0.0
  %94 = vmatpush1.msra.mxu0 0.0
  %95 = vmatprep.subr.mxu0 0.0
  %96 = vmatpush1.msra.mxu0 0.0
  %97 = vmatprep.subr.mxu0 0.0
  %98 = vmatpush1.msra.mxu0 0.0
  %99 = vmatprep.subr.mxu0 0.0
  %100 = vmatpush1.msra.mxu0 0.0
  %101 = vmatprep.subr.mxu0 0.0
  %102 = vmatpush1.msra.mxu0 0.0
  %103 = vmatprep.subr.mxu0 0.0
  %104 = vmatpush1.msra.mxu0 0.0
  %105 = vmatprep.subr.mxu0 0.0
  %106 = vmatpush1.msra.mxu0 0.0
  %107 = vmatprep.subr.mxu0 0.0
  %108 = vmatpush1.msra.mxu0 0.0
  %109 = vmatprep.subr.mxu0 0.0
  %110 = vmatpush1.msra.mxu0 0.0
  %111 = vmatprep.subr.mxu0 0.0
  %112 = vmatpush1.msra.mxu0 0.0
  %113 = vmatprep.subr.mxu0 0.0
  %114 = vmatpush1.msra.mxu0 0.0
  %115 = vmatprep.subr.mxu0 0.0
  %116 = vmatpush1.msra.mxu0 0.0
  %117 = vmatprep.subr.mxu0 0.0
  %118 = vmatpush1.msra.mxu0 0.0
  %119 = vmatprep.subr.mxu0 0.0
  %120 = vmatpush1.msra.mxu0 0.0
  %121 = vmatprep.subr.mxu0 0.0
  %122 = vmatpush1.msra.mxu0 0.0
  %123 = vmatprep.subr.mxu0 0.0
  %124 = vmatpush1.msra.mxu0 0.0
  %125 = vmatprep.subr.mxu0 0.0
  %126 = vmatpush1.msra.mxu0 0.0
  %127 = vmatprep.subr.mxu0 0.0
  %128 = vmatpush1.msra.mxu0 0.0
  %129 = vmatprep.subr.mxu0 0.0
  %130 = vmatpush1.msra.mxu0 0.0
  %131 = vmatprep.subr.mxu0 0.0
  %132 = vmatpush1.msra.mxu0 0.0
  %133 = vmatprep.subr.mxu0 0.0
  %134 = vmatpush1.msra.mxu0 0.0
  %135 = vmatprep.subr.mxu0 0.0
  %136 = vmatpush1.msra.mxu0 0.0
  %137 = vmatprep.subr.mxu0 0.0
  %138 = vmatpush1.msra.mxu0 0.0
  %139 = vmatprep.subr.mxu0 0.0
  %140 = vmatpush1.msra.mxu0 0.0
  %141 = vmatprep.subr.mxu0 0.0
  %142 = vmatpush1.msra.mxu0 0.0
  %143 = vmatprep.mubr.f32.mxu0 0.0
  %144 = vmatmul.mubr.f32.gmra.mrb[0].mxu0 %v56
  %v145 = vpop.f32.mrb[0].mxu0
  %v146 = vadd.f32 %v52, %v145
  %v147 = vpop.f32.mrb[0].mxu0
  %148 = vmatprep.mubr.f32.mxu0 0.0
  %149 = vmatmul.mubr.f32.gmra.mrb[0].mxu0 %v59
  %v150 = vpop.f32.mrb[0].mxu0
  %v151 = vadd.f32 %v52, %v150
  %v152 = vpop.f32.mrb[0].mxu0
  %153 = vmatprep.mubr.f32.mxu0 0.0
  %154 = vmatmul.mubr.f32.gmra.mrb[0].mxu0 %v62
  %v155 = vpop.f32.mrb[0].mxu0
  %v156 = vadd.f32 %v52, %v155
  %v157 = vpop.f32.mrb[0].mxu0
  %158 = vmatprep.mubr.f32.mxu0 0.0
  %159 = vmatmul.mubr.f32.gmra.mrb[0].mxu0 %v65
  %v160 = vpop.f32.mrb[0].mxu0
  %v161 = vadd.f32 %v52, %v160
  %v162 = vpop.f32.mrb[0].mxu0
  %163 = vmatprep.mubr.f32.mxu0 0.0
  %164 = vmatmul.mubr.f32.gmra.mrb[0].mxu0 %v68
  %v165 = vpop.f32.mrb[0].mxu0
  %v166 = vadd.f32 %v52, %v165
  %v167 = vpop.f32.mrb[0].mxu0
  %168 = vmatprep.mubr.f32.mxu0 0.0
  %169 = vmatmul.mubr.f32.gmra.mrb[0].mxu0 %v71
  %v170 = vpop.f32.mrb[0].mxu0
  %v171 = vadd.f32 %v52, %v170
  %v172 = vpop.f32.mrb[0].mxu0
  %173 = vmatprep.mubr.f32.mxu0 0.0
  %174 = vmatmul.mubr.f32.gmra.mrb[0].mxu0 %v74
  %v175 = vpop.f32.mrb[0].mxu0
  %v176 = vadd.f32 %v52, %v175
  %v177 = vpop.f32.mrb[0].mxu0
  %178 = vmatprep.mubr.f32.mxu0 0.0
  %179 = vmatmul.mubr.f32.gmra.mrb[0].mxu0 %v77
  %v180 = vpop.f32.mrb[0].mxu0
  %v181 = vadd.f32 %v52, %v180
  %v182 = vpop.f32.mrb[0].mxu0
  %183 = vdwg.mxu0
  %184 = vst [vmem:[#allocation3] sm:$0xff] %v146
  %185 = vst [vmem:[#allocation3 + $0x8] sm:$0xff] %v151
  %186 = vst [vmem:[#allocation3 + $0x10] sm:$0xff] %v156
  %187 = vst [vmem:[#allocation3 + $0x18] sm:$0xff] %v161
  %188 = vst [vmem:[#allocation3 + $0x20] sm:$0xff] %v166
  %189 = vst [vmem:[#allocation3 + $0x28] sm:$0xff] %v171
  %190 = vst [vmem:[#allocation3 + $0x30] sm:$0xff] %v176
  %191 = vst [vmem:[#allocation3 + $0x38] sm:$0xff] %v181
  %v192 = vld [vmem:[%s2] sm:$0xff]
  %v193 = vld [vmem:[%s2 + $0x8] sm:$0xff]
  %v194 = vld [vmem:[%s2 + $0x10] sm:$0xff]
  %v195 = vld [vmem:[%s2 + $0x18] sm:$0xff]
  %v196 = vld [vmem:[#allocation3] sm:$0xff]
  %v198 = vsel %vm54, 0.0, 0
  %200 = vmatprep.subr.mxu0 0.0
  %201 = vmatpush1.msra.mxu0 %v192
  %202 = vmatprep.subr.mxu0 0.0
  %203 = vmatpush1.msra.mxu0 %v193
  %204 = vmatprep.subr.mxu0 0.0
  %205 = vmatpush1.msra.mxu0 %v194
  %206 = vmatprep.subr.mxu0 0.0
  %207 = vmatpush1.msra.mxu0 %v195
  %208 = vmatprep.subr.mxu0 0.0
  %209 = vmatpush1.msra.mxu0 0.0
  %210 = vmatprep.subr.mxu0 0.0
  %211 = vmatpush1.msra.mxu0 0.0
  %212 = vmatprep.subr.mxu0 0.0
  %213 = vmatpush1.msra.mxu0 0.0
  %214 = vmatprep.subr.mxu0 0.0
  %215 = vmatpush1.msra.mxu0 0.0
  %216 = vmatprep.subr.mxu0 0.0
  %217 = vmatpush1.msra.mxu0 0.0
  %218 = vmatprep.subr.mxu0 0.0
  %219 = vmatpush1.msra.mxu0 0.0
  %220 = vmatprep.subr.mxu0 0.0
  %221 = vmatpush1.msra.mxu0 0.0
  %222 = vmatprep.subr.mxu0 0.0
  %223 = vmatpush1.msra.mxu0 0.0
  %224 = vmatprep.subr.mxu0 0.0
  %225 = vmatpush1.msra.mxu0 0.0
  %226 = vmatprep.subr.mxu0 0.0
  %227 = vmatpush1.msra.mxu0 0.0
  %228 = vmatprep.subr.mxu0 0.0
  %229 = vmatpush1.msra.mxu0 0.0
  %230 = vmatprep.subr.mxu0 0.0
  %231 = vmatpush1.msra.mxu0 0.0
  %232 = vmatprep.subr.mxu0 0.0
  %233 = vmatpush1.msra.mxu0 0.0
  %234 = vmatprep.subr.mxu0 0.0
  %235 = vmatpush1.msra.mxu0 0.0
  %236 = vmatprep.subr.mxu0 0.0
  %237 = vmatpush1.msra.mxu0 0.0
  %238 = vmatprep.subr.mxu0 0.0
  %239 = vmatpush1.msra.mxu0 0.0
  %240 = vmatprep.subr.mxu0 0.0
  %241 = vmatpush1.msra.mxu0 0.0
  %242 = vmatprep.subr.mxu0 0.0
  %243 = vmatpush1.msra.mxu0 0.0
  %244 = vmatprep.subr.mxu0 0.0
  %245 = vmatpush1.msra.mxu0 0.0
  %246 = vmatprep.subr.mxu0 0.0
  %247 = vmatpush1.msra.mxu0 0.0
  %248 = vmatprep.subr.mxu0 0.0
  %249 = vmatpush1.msra.mxu0 0.0
  %250 = vmatprep.subr.mxu0 0.0
  %251 = vmatpush1.msra.mxu0 0.0
  %252 = vmatprep.subr.mxu0 0.0
  %253 = vmatpush1.msra.mxu0 0.0
  %254 = vmatprep.subr.mxu0 0.0
  %255 = vmatpush1.msra.mxu0 0.0
  %256 = vmatprep.subr.mxu0 0.0
  %257 = vmatpush1.msra.mxu0 0.0
  %258 = vmatprep.subr.mxu0 0.0
  %259 = vmatpush1.msra.mxu0 0.0
  %260 = vmatprep.subr.mxu0 0.0
  %261 = vmatpush1.msra.mxu0 0.0
  %262 = vmatprep.subr.mxu0 0.0
  %263 = vmatpush1.msra.mxu0 0.0
  %264 = vmatprep.mubr.f32.mxu0 0.0
  %265 = vmatmul.mubr.f32.gmra.mrb[0].mxu0 %v198
  %v266 = vpop.f32.mrb[0].mxu0
  %v267 = vadd.f32 0.0, %v266
  %v268 = vpop.f32.mrb[0].mxu0
  %269 = vdwg.mxu0
  %v270 = vadd.f32 %v196, %v267
  %v271 = vxor.u32 %v270, 2147483648
  %v272 = vmul.f32 %v271, 1.442695
  %v273 = vpow.pop %v272
  %v274 = vadd.f32 %v273, 1.0
  %v275 = vrcp.pop %v274
  %v276 = vmul.f32 1.0, %v275
  %v277 = vtanh.pop %v270
  %v278 = vmul.f32 %v276, 0.0
  %280 = vrot.lane.b32.xlu0 %v277, 64
  %v281 = vpop.permute.xlu0 %280
  %v283 = vmul.f32 %v276, %v281
  %285 = vrot.lane.b32.xlu0 %v283, 32
  %v286 = vpop.permute.xlu0 %285
  %v288 = vadd.f32 %v278, %v286
  %v289 = vtanh.pop %v288
  %291 = vrot.lane.b32.xlu0 %v289, 64
  %v292 = vpop.permute.xlu0 %291
  %v294 = vmul.f32 %v276, %v292
  %296 = vrot.lane.b32.xlu0 %v294, 32
  %v297 = vpop.permute.xlu0 %296
  %299 = vst.msk [vmem:[#allocation2] sm:$0xff] %vm54, %v297
  %v300 = vld [vmem:[#allocation3 + $0x8] sm:$0xff]
  %v301 = vsel %vm54, %v297, 0
  %303 = vmatprep.subr.mxu0 0.0
  %304 = vmatpush1.msra.mxu0 %v192
  %305 = vmatprep.subr.mxu0 0.0
  %306 = vmatpush1.msra.mxu0 %v193
  %307 = vmatprep.subr.mxu0 0.0
  %308 = vmatpush1.msra.mxu0 %v194
  %309 = vmatprep.subr.mxu0 0.0
  %310 = vmatpush1.msra.mxu0 %v195
  %311 = vmatprep.subr.mxu0 0.0
  %312 = vmatpush1.msra.mxu0 0.0
  %313 = vmatprep.subr.mxu0 0.0
  %314 = vmatpush1.msra.mxu0 0.0
  %315 = vmatprep.subr.mxu0 0.0
  %316 = vmatpush1.msra.mxu0 0.0
  %317 = vmatprep.subr.mxu0 0.0
  %318 = vmatpush1.msra.mxu0 0.0
  %319 = vmatprep.subr.mxu0 0.0
  %320 = vmatpush1.msra.mxu0 0.0
  %321 = vmatprep.subr.mxu0 0.0
  %322 = vmatpush1.msra.mxu0 0.0
  %323 = vmatprep.subr.mxu0 0.0
  %324 = vmatpush1.msra.mxu0 0.0
  %325 = vmatprep.subr.mxu0 0.0
  %326 = vmatpush1.msra.mxu0 0.0
  %327 = vmatprep.subr.mxu0 0.0
  %328 = vmatpush1.msra.mxu0 0.0
  %329 = vmatprep.subr.mxu0 0.0
  %330 = vmatpush1.msra.mxu0 0.0
  %331 = vmatprep.subr.mxu0 0.0
  %332 = vmatpush1.msra.mxu0 0.0
  %333 = vmatprep.subr.mxu0 0.0
  %334 = vmatpush1.msra.mxu0 0.0
  %335 = vmatprep.subr.mxu0 0.0
  %336 = vmatpush1.msra.mxu0 0.0
  %337 = vmatprep.subr.mxu0 0.0
  %338 = vmatpush1.msra.mxu0 0.0
  %339 = vmatprep.subr.mxu0 0.0
  %340 = vmatpush1.msra.mxu0 0.0
  %341 = vmatprep.subr.mxu0 0.0
  %342 = vmatpush1.msra.mxu0 0.0
  %343 = vmatprep.subr.mxu0 0.0
  %344 = vmatpush1.msra.mxu0 0.0
  %345 = vmatprep.subr.mxu0 0.0
  %346 = vmatpush1.msra.mxu0 0.0
  %347 = vmatprep.subr.mxu0 0.0
  %348 = vmatpush1.msra.mxu0 0.0
  %349 = vmatprep.subr.mxu0 0.0
  %350 = vmatpush1.msra.mxu0 0.0
  %351 = vmatprep.subr.mxu0 0.0
  %352 = vmatpush1.msra.mxu0 0.0
  %353 = vmatprep.subr.mxu0 0.0
  %354 = vmatpush1.msra.mxu0 0.0
  %355 = vmatprep.subr.mxu0 0.0
  %356 = vmatpush1.msra.mxu0 0.0
  %357 = vmatprep.subr.mxu0 0.0
  %358 = vmatpush1.msra.mxu0 0.0
  %359 = vmatprep.subr.mxu0 0.0
  %360 = vmatpush1.msra.mxu0 0.0
  %361 = vmatprep.subr.mxu0 0.0
  %362 = vmatpush1.msra.mxu0 0.0
  %363 = vmatprep.subr.mxu0 0.0
  %364 = vmatpush1.msra.mxu0 0.0
  %365 = vmatprep.subr.mxu0 0.0
  %366 = vmatpush1.msra.mxu0 0.0
  %367 = vmatprep.mubr.f32.mxu0 0.0
  %368 = vmatmul.mubr.f32.gmra.mrb[0].mxu0 %v301
  %v369 = vpop.f32.mrb[0].mxu0
  %v370 = vadd.f32 0.0, %v369
  %v371 = vpop.f32.mrb[0].mxu0
  %372 = vdwg.mxu0
  %v373 = vadd.f32 %v300, %v370
  %v374 = vxor.u32 %v373, 2147483648
  %v375 = vmul.f32 %v374, 1.442695
  %v376 = vpow.pop %v375
  %v377 = vadd.f32 %v376, 1.0
  %v378 = vrcp.pop %v377
  %v379 = vmul.f32 1.0, %v378
  %v380 = vtanh.pop %v373
  %v381 = vmul.f32 %v379, %v288
  %383 = vrot.lane.b32.xlu0 %v380, 64
  %v384 = vpop.permute.xlu0 %383
  %v386 = vmul.f32 %v379, %v384
  %388 = vrot.lane.b32.xlu0 %v386, 32
  %v389 = vpop.permute.xlu0 %388
  %v391 = vadd.f32 %v381, %v389
  %v392 = vtanh.pop %v391
  %394 = vrot.lane.b32.xlu0 %v392, 64
  %v395 = vpop.permute.xlu0 %394
  %v397 = vmul.f32 %v379, %v395
  %399 = vrot.lane.b32.xlu0 %v397, 32
  %v400 = vpop.permute.xlu0 %399
  %402 = vst.msk [vmem:[#allocation2 + $0x8] sm:$0xff] %vm54, %v400
  %v403 = vld [vmem:[#allocation3 + $0x10] sm:$0xff]
  %v404 = vsel %vm54, %v400, 0
  %406 = vmatprep.subr.mxu0 0.0
  %407 = vmatpush1.msra.mxu0 %v192
  %408 = vmatprep.subr.mxu0 0.0
  %409 = vmatpush1.msra.mxu0 %v193
  %410 = vmatprep.subr.mxu0 0.0
  %411 = vmatpush1.msra.mxu0 %v194
  %412 = vmatprep.subr.mxu0 0.0
  %413 = vmatpush1.msra.mxu0 %v195
  %414 = vmatprep.subr.mxu0 0.0
  %415 = vmatpush1.msra.mxu0 0.0
  %416 = vmatprep.subr.mxu0 0.0
  %417 = vmatpush1.msra.mxu0 0.0
  %418 = vmatprep.subr.mxu0 0.0
  %419 = vmatpush1.msra.mxu0 0.0
  %420 = vmatprep.subr.mxu0 0.0
  %421 = vmatpush1.msra.mxu0 0.0
  %422 = vmatprep.subr.mxu0 0.0
  %423 = vmatpush1.msra.mxu0 0.0
  %424 = vmatprep.subr.mxu0 0.0
  %425 = vmatpush1.msra.mxu0 0.0
  %426 = vmatprep.subr.mxu0 0.0
  %427 = vmatpush1.msra.mxu0 0.0
  %428 = vmatprep.subr.mxu0 0.0
  %429 = vmatpush1.msra.mxu0 0.0
  %430 = vmatprep.subr.mxu0 0.0
  %431 = vmatpush1.msra.mxu0 0.0
  %432 = vmatprep.subr.mxu0 0.0
  %433 = vmatpush1.msra.mxu0 0.0
  %434 = vmatprep.subr.mxu0 0.0
  %435 = vmatpush1.msra.mxu0 0.0
  %436 = vmatprep.subr.mxu0 0.0
  %437 = vmatpush1.msra.mxu0 0.0
  %438 = vmatprep.subr.mxu0 0.0
  %439 = vmatpush1.msra.mxu0 0.0
  %440 = vmatprep.subr.mxu0 0.0
  %441 = vmatpush1.msra.mxu0 0.0
  %442 = vmatprep.subr.mxu0 0.0
  %443 = vmatpush1.msra.mxu0 0.0
  %444 = vmatprep.subr.mxu0 0.0
  %445 = vmatpush1.msra.mxu0 0.0
  %446 = vmatprep.subr.mxu0 0.0
  %447 = vmatpush1.msra.mxu0 0.0
  %448 = vmatprep.subr.mxu0 0.0
  %449 = vmatpush1.msra.mxu0 0.0
  %450 = vmatprep.subr.mxu0 0.0
  %451 = vmatpush1.msra.mxu0 0.0
  %452 = vmatprep.subr.mxu0 0.0
  %453 = vmatpush1.msra.mxu0 0.0
  %454 = vmatprep.subr.mxu0 0.0
  %455 = vmatpush1.msra.mxu0 0.0
  %456 = vmatprep.subr.mxu0 0.0
  %457 = vmatpush1.msra.mxu0 0.0
  %458 = vmatprep.subr.mxu0 0.0
  %459 = vmatpush1.msra.mxu0 0.0
  %460 = vmatprep.subr.mxu0 0.0
  %461 = vmatpush1.msra.mxu0 0.0
  %462 = vmatprep.subr.mxu0 0.0
  %463 = vmatpush1.msra.mxu0 0.0
  %464 = vmatprep.subr.mxu0 0.0
  %465 = vmatpush1.msra.mxu0 0.0
  %466 = vmatprep.subr.mxu0 0.0
  %467 = vmatpush1.msra.mxu0 0.0
  %468 = vmatprep.subr.mxu0 0.0
  %469 = vmatpush1.msra.mxu0 0.0
  %470 = vmatprep.mubr.f32.mxu0 0.0
  %471 = vmatmul.mubr.f32.gmra.mrb[0].mxu0 %v404
  %v472 = vpop.f32.mrb[0].mxu0
  %v473 = vadd.f32 0.0, %v472
  %v474 = vpop.f32.mrb[0].mxu0
  %475 = vdwg.mxu0
  %v476 = vadd.f32 %v403, %v473
  %v477 = vxor.u32 %v476, 2147483648
  %v478 = vmul.f32 %v477, 1.442695
  %v479 = vpow.pop %v478
  %v480 = vadd.f32 %v479, 1.0
  %v481 = vrcp.pop %v480
  %v482 = vmul.f32 1.0, %v481
  %v483 = vtanh.pop %v476
  %v484 = vmul.f32 %v482, %v391
  %486 = vrot.lane.b32.xlu0 %v483, 64
  %v487 = vpop.permute.xlu0 %486
  %v489 = vmul.f32 %v482, %v487
  %491 = vrot.lane.b32.xlu0 %v489, 32
  %v492 = vpop.permute.xlu0 %491
  %v494 = vadd.f32 %v484, %v492
  %v495 = vtanh.pop %v494
  %497 = vrot.lane.b32.xlu0 %v495, 64
  %v498 = vpop.permute.xlu0 %497
  %v500 = vmul.f32 %v482, %v498
  %502 = vrot.lane.b32.xlu0 %v500, 32
  %v503 = vpop.permute.xlu0 %502
  %505 = vst.msk [vmem:[#allocation2 + $0x10] sm:$0xff] %vm54, %v503
  %v506 = vld [vmem:[#allocation3 + $0x18] sm:$0xff]
  %v507 = vsel %vm54, %v503, 0
  %509 = vmatprep.subr.mxu0 0.0
  %510 = vmatpush1.msra.mxu0 %v192
  %511 = vmatprep.subr.mxu0 0.0
  %512 = vmatpush1.msra.mxu0 %v193
  %513 = vmatprep.subr.mxu0 0.0
  %514 = vmatpush1.msra.mxu0 %v194
  %515 = vmatprep.subr.mxu0 0.0
  %516 = vmatpush1.msra.mxu0 %v195
  %517 = vmatprep.subr.mxu0 0.0
  %518 = vmatpush1.msra.mxu0 0.0
  %519 = vmatprep.subr.mxu0 0.0
  %520 = vmatpush1.msra.mxu0 0.0
  %521 = vmatprep.subr.mxu0 0.0
  %522 = vmatpush1.msra.mxu0 0.0
  %523 = vmatprep.subr.mxu0 0.0
  %524 = vmatpush1.msra.mxu0 0.0
  %525 = vmatprep.subr.mxu0 0.0
  %526 = vmatpush1.msra.mxu0 0.0
  %527 = vmatprep.subr.mxu0 0.0
  %528 = vmatpush1.msra.mxu0 0.0
  %529 = vmatprep.subr.mxu0 0.0
  %530 = vmatpush1.msra.mxu0 0.0
  %531 = vmatprep.subr.mxu0 0.0
  %532 = vmatpush1.msra.mxu0 0.0
  %533 = vmatprep.subr.mxu0 0.0
  %534 = vmatpush1.msra.mxu0 0.0
  %535 = vmatprep.subr.mxu0 0.0
  %536 = vmatpush1.msra.mxu0 0.0
  %537 = vmatprep.subr.mxu0 0.0
  %538 = vmatpush1.msra.mxu0 0.0
  %539 = vmatprep.subr.mxu0 0.0
  %540 = vmatpush1.msra.mxu0 0.0
  %541 = vmatprep.subr.mxu0 0.0
  %542 = vmatpush1.msra.mxu0 0.0
  %543 = vmatprep.subr.mxu0 0.0
  %544 = vmatpush1.msra.mxu0 0.0
  %545 = vmatprep.subr.mxu0 0.0
  %546 = vmatpush1.msra.mxu0 0.0
  %547 = vmatprep.subr.mxu0 0.0
  %548 = vmatpush1.msra.mxu0 0.0
  %549 = vmatprep.subr.mxu0 0.0
  %550 = vmatpush1.msra.mxu0 0.0
  %551 = vmatprep.subr.mxu0 0.0
  %552 = vmatpush1.msra.mxu0 0.0
  %553 = vmatprep.subr.mxu0 0.0
  %554 = vmatpush1.msra.mxu0 0.0
  %555 = vmatprep.subr.mxu0 0.0
  %556 = vmatpush1.msra.mxu0 0.0
  %557 = vmatprep.subr.mxu0 0.0
  %558 = vmatpush1.msra.mxu0 0.0
  %559 = vmatprep.subr.mxu0 0.0
  %560 = vmatpush1.msra.mxu0 0.0
  %561 = vmatprep.subr.mxu0 0.0
  %562 = vmatpush1.msra.mxu0 0.0
  %563 = vmatprep.subr.mxu0 0.0
  %564 = vmatpush1.msra.mxu0 0.0
  %565 = vmatprep.subr.mxu0 0.0
  %566 = vmatpush1.msra.mxu0 0.0
  %567 = vmatprep.subr.mxu0 0.0
  %568 = vmatpush1.msra.mxu0 0.0
  %569 = vmatprep.subr.mxu0 0.0
  %570 = vmatpush1.msra.mxu0 0.0
  %571 = vmatprep.subr.mxu0 0.0
  %572 = vmatpush1.msra.mxu0 0.0
  %573 = vmatprep.mubr.f32.mxu0 0.0
  %574 = vmatmul.mubr.f32.gmra.mrb[0].mxu0 %v507
  %v575 = vpop.f32.mrb[0].mxu0
  %v576 = vadd.f32 0.0, %v575
  %v577 = vpop.f32.mrb[0].mxu0
  %578 = vdwg.mxu0
  %v579 = vadd.f32 %v506, %v576
  %v580 = vxor.u32 %v579, 2147483648
  %v581 = vmul.f32 %v580, 1.442695
  %v582 = vpow.pop %v581
  %v583 = vadd.f32 %v582, 1.0
  %v584 = vrcp.pop %v583
  %v585 = vmul.f32 1.0, %v584
  %v586 = vtanh.pop %v579
  %v587 = vmul.f32 %v585, %v494
  %589 = vrot.lane.b32.xlu0 %v586, 64
  %v590 = vpop.permute.xlu0 %589
  %v592 = vmul.f32 %v585, %v590
  %594 = vrot.lane.b32.xlu0 %v592, 32
  %v595 = vpop.permute.xlu0 %594
  %v597 = vadd.f32 %v587, %v595
  %v598 = vtanh.pop %v597
  %600 = vrot.lane.b32.xlu0 %v598, 64
  %v601 = vpop.permute.xlu0 %600
  %v603 = vmul.f32 %v585, %v601
  %605 = vrot.lane.b32.xlu0 %v603, 32
  %v606 = vpop.permute.xlu0 %605
  %608 = vst.msk [vmem:[#allocation2 + $0x18] sm:$0xff] %vm54, %v606
  %v609 = vld [vmem:[#allocation3 + $0x20] sm:$0xff]
  %v610 = vsel %vm54, %v606, 0
  %612 = vmatprep.subr.mxu0 0.0
  %613 = vmatpush1.msra.mxu0 %v192
  %614 = vmatprep.subr.mxu0 0.0
  %615 = vmatpush1.msra.mxu0 %v193
  %616 = vmatprep.subr.mxu0 0.0
  %617 = vmatpush1.msra.mxu0 %v194
  %618 = vmatprep.subr.mxu0 0.0
  %619 = vmatpush1.msra.mxu0 %v195
  %620 = vmatprep.subr.mxu0 0.0
  %621 = vmatpush1.msra.mxu0 0.0
  %622 = vmatprep.subr.mxu0 0.0
  %623 = vmatpush1.msra.mxu0 0.0
  %624 = vmatprep.subr.mxu0 0.0
  %625 = vmatpush1.msra.mxu0 0.0
  %626 = vmatprep.subr.mxu0 0.0
  %627 = vmatpush1.msra.mxu0 0.0
  %628 = vmatprep.subr.mxu0 0.0
  %629 = vmatpush1.msra.mxu0 0.0
  %630 = vmatprep.subr.mxu0 0.0
  %631 = vmatpush1.msra.mxu0 0.0
  %632 = vmatprep.subr.mxu0 0.0
  %633 = vmatpush1.msra.mxu0 0.0
  %634 = vmatprep.subr.mxu0 0.0
  %635 = vmatpush1.msra.mxu0 0.0
  %636 = vmatprep.subr.mxu0 0.0
  %637 = vmatpush1.msra.mxu0 0.0
  %638 = vmatprep.subr.mxu0 0.0
  %639 = vmatpush1.msra.mxu0 0.0
  %640 = vmatprep.subr.mxu0 0.0
  %641 = vmatpush1.msra.mxu0 0.0
  %642 = vmatprep.subr.mxu0 0.0
  %643 = vmatpush1.msra.mxu0 0.0
  %644 = vmatprep.subr.mxu0 0.0
  %645 = vmatpush1.msra.mxu0 0.0
  %646 = vmatprep.subr.mxu0 0.0
  %647 = vmatpush1.msra.mxu0 0.0
  %648 = vmatprep.subr.mxu0 0.0
  %649 = vmatpush1.msra.mxu0 0.0
  %650 = vmatprep.subr.mxu0 0.0
  %651 = vmatpush1.msra.mxu0 0.0
  %652 = vmatprep.subr.mxu0 0.0
  %653 = vmatpush1.msra.mxu0 0.0
  %654 = vmatprep.subr.mxu0 0.0
  %655 = vmatpush1.msra.mxu0 0.0
  %656 = vmatprep.subr.mxu0 0.0
  %657 = vmatpush1.msra.mxu0 0.0
  %658 = vmatprep.subr.mxu0 0.0
  %659 = vmatpush1.msra.mxu0 0.0
  %660 = vmatprep.subr.mxu0 0.0
  %661 = vmatpush1.msra.mxu0 0.0
  %662 = vmatprep.subr.mxu0 0.0
  %663 = vmatpush1.msra.mxu0 0.0
  %664 = vmatprep.subr.mxu0 0.0
  %665 = vmatpush1.msra.mxu0 0.0
  %666 = vmatprep.subr.mxu0 0.0
  %667 = vmatpush1.msra.mxu0 0.0
  %668 = vmatprep.subr.mxu0 0.0
  %669 = vmatpush1.msra.mxu0 0.0
  %670 = vmatprep.subr.mxu0 0.0
  %671 = vmatpush1.msra.mxu0 0.0
  %672 = vmatprep.subr.mxu0 0.0
  %673 = vmatpush1.msra.mxu0 0.0
  %674 = vmatprep.subr.mxu0 0.0
  %675 = vmatpush1.msra.mxu0 0.0
  %676 = vmatprep.mubr.f32.mxu0 0.0
  %677 = vmatmul.mubr.f32.gmra.mrb[0].mxu0 %v610
  %v678 = vpop.f32.mrb[0].mxu0
  %v679 = vadd.f32 0.0, %v678
  %v680 = vpop.f32.mrb[0].mxu0
  %681 = vdwg.mxu0
  %v682 = vadd.f32 %v609, %v679
  %v683 = vxor.u32 %v682, 2147483648
  %v684 = vmul.f32 %v683, 1.442695
  %v685 = vpow.pop %v684
  %v686 = vadd.f32 %v685, 1.0
  %v687 = vrcp.pop %v686
  %v688 = vmul.f32 1.0, %v687
  %v689 = vtanh.pop %v682
  %v690 = vmul.f32 %v688, %v597
  %692 = vrot.lane.b32.xlu0 %v689, 64
  %v693 = vpop.permute.xlu0 %692
  %v695 = vmul.f32 %v688, %v693
  %697 = vrot.lane.b32.xlu0 %v695, 32
  %v698 = vpop.permute.xlu0 %697
  %v700 = vadd.f32 %v690, %v698
  %v701 = vtanh.pop %v700
  %703 = vrot.lane.b32.xlu0 %v701, 64
  %v704 = vpop.permute.xlu0 %703
  %v706 = vmul.f32 %v688, %v704
  %708 = vrot.lane.b32.xlu0 %v706, 32
  %v709 = vpop.permute.xlu0 %708
  %711 = vst.msk [vmem:[#allocation2 + $0x20] sm:$0xff] %vm54, %v709
  %v712 = vld [vmem:[#allocation3 + $0x28] sm:$0xff]
  %v713 = vsel %vm54, %v709, 0
  %715 = vmatprep.subr.mxu0 0.0
  %716 = vmatpush1.msra.mxu0 %v192
  %717 = vmatprep.subr.mxu0 0.0
  %718 = vmatpush1.msra.mxu0 %v193
  %719 = vmatprep.subr.mxu0 0.0
  %720 = vmatpush1.msra.mxu0 %v194
  %721 = vmatprep.subr.mxu0 0.0
  %722 = vmatpush1.msra.mxu0 %v195
  %723 = vmatprep.subr.mxu0 0.0
  %724 = vmatpush1.msra.mxu0 0.0
  %725 = vmatprep.subr.mxu0 0.0
  %726 = vmatpush1.msra.mxu0 0.0
  %727 = vmatprep.subr.mxu0 0.0
  %728 = vmatpush1.msra.mxu0 0.0
  %729 = vmatprep.subr.mxu0 0.0
  %730 = vmatpush1.msra.mxu0 0.0
  %731 = vmatprep.subr.mxu0 0.0
  %732 = vmatpush1.msra.mxu0 0.0
  %733 = vmatprep.subr.mxu0 0.0
  %734 = vmatpush1.msra.mxu0 0.0
  %735 = vmatprep.subr.mxu0 0.0
  %736 = vmatpush1.msra.mxu0 0.0
  %737 = vmatprep.subr.mxu0 0.0
  %738 = vmatpush1.msra.mxu0 0.0
  %739 = vmatprep.subr.mxu0 0.0
  %740 = vmatpush1.msra.mxu0 0.0
  %741 = vmatprep.subr.mxu0 0.0
  %742 = vmatpush1.msra.mxu0 0.0
  %743 = vmatprep.subr.mxu0 0.0
  %744 = vmatpush1.msra.mxu0 0.0
  %745 = vmatprep.subr.mxu0 0.0
  %746 = vmatpush1.msra.mxu0 0.0
  %747 = vmatprep.subr.mxu0 0.0
  %748 = vmatpush1.msra.mxu0 0.0
  %749 = vmatprep.subr.mxu0 0.0
  %750 = vmatpush1.msra.mxu0 0.0
  %751 = vmatprep.subr.mxu0 0.0
  %752 = vmatpush1.msra.mxu0 0.0
  %753 = vmatprep.subr.mxu0 0.0
  %754 = vmatpush1.msra.mxu0 0.0
  %755 = vmatprep.subr.mxu0 0.0
  %756 = vmatpush1.msra.mxu0 0.0
  %757 = vmatprep.subr.mxu0 0.0
  %758 = vmatpush1.msra.mxu0 0.0
  %759 = vmatprep.subr.mxu0 0.0
  %760 = vmatpush1.msra.mxu0 0.0
  %761 = vmatprep.subr.mxu0 0.0
  %762 = vmatpush1.msra.mxu0 0.0
  %763 = vmatprep.subr.mxu0 0.0
  %764 = vmatpush1.msra.mxu0 0.0
  %765 = vmatprep.subr.mxu0 0.0
  %766 = vmatpush1.msra.mxu0 0.0
  %767 = vmatprep.subr.mxu0 0.0
  %768 = vmatpush1.msra.mxu0 0.0
  %769 = vmatprep.subr.mxu0 0.0
  %770 = vmatpush1.msra.mxu0 0.0
  %771 = vmatprep.subr.mxu0 0.0
  %772 = vmatpush1.msra.mxu0 0.0
  %773 = vmatprep.subr.mxu0 0.0
  %774 = vmatpush1.msra.mxu0 0.0
  %775 = vmatprep.subr.mxu0 0.0
  %776 = vmatpush1.msra.mxu0 0.0
  %777 = vmatprep.subr.mxu0 0.0
  %778 = vmatpush1.msra.mxu0 0.0
  %779 = vmatprep.mubr.f32.mxu0 0.0
  %780 = vmatmul.mubr.f32.gmra.mrb[0].mxu0 %v713
  %v781 = vpop.f32.mrb[0].mxu0
  %v782 = vadd.f32 0.0, %v781
  %v783 = vpop.f32.mrb[0].mxu0
  %784 = vdwg.mxu0
  %v785 = vadd.f32 %v712, %v782
  %v786 = vxor.u32 %v785, 2147483648
  %v787 = vmul.f32 %v786, 1.442695
  %v788 = vpow.pop %v787
  %v789 = vadd.f32 %v788, 1.0
  %v790 = vrcp.pop %v789
  %v791 = vmul.f32 1.0, %v790
  %v792 = vtanh.pop %v785
  %v793 = vmul.f32 %v791, %v700
  %795 = vrot.lane.b32.xlu0 %v792, 64
  %v796 = vpop.permute.xlu0 %795
  %v798 = vmul.f32 %v791, %v796
  %800 = vrot.lane.b32.xlu0 %v798, 32
  %v801 = vpop.permute.xlu0 %800
  %v803 = vadd.f32 %v793, %v801
  %v804 = vtanh.pop %v803
  %806 = vrot.lane.b32.xlu0 %v804, 64
  %v807 = vpop.permute.xlu0 %806
  %v809 = vmul.f32 %v791, %v807
  %811 = vrot.lane.b32.xlu0 %v809, 32
  %v812 = vpop.permute.xlu0 %811
  %814 = vst.msk [vmem:[#allocation2 + $0x28] sm:$0xff] %vm54, %v812
  %v815 = vld [vmem:[#allocation3 + $0x30] sm:$0xff]
  %v816 = vsel %vm54, %v812, 0
  %818 = vmatprep.subr.mxu0 0.0
  %819 = vmatpush1.msra.mxu0 %v192
  %820 = vmatprep.subr.mxu0 0.0
  %821 = vmatpush1.msra.mxu0 %v193
  %822 = vmatprep.subr.mxu0 0.0
  %823 = vmatpush1.msra.mxu0 %v194
  %824 = vmatprep.subr.mxu0 0.0
  %825 = vmatpush1.msra.mxu0 %v195
  %826 = vmatprep.subr.mxu0 0.0
  %827 = vmatpush1.msra.mxu0 0.0
  %828 = vmatprep.subr.mxu0 0.0
  %829 = vmatpush1.msra.mxu0 0.0
  %830 = vmatprep.subr.mxu0 0.0
  %831 = vmatpush1.msra.mxu0 0.0
  %832 = vmatprep.subr.mxu0 0.0
  %833 = vmatpush1.msra.mxu0 0.0
  %834 = vmatprep.subr.mxu0 0.0
  %835 = vmatpush1.msra.mxu0 0.0
  %836 = vmatprep.subr.mxu0 0.0
  %837 = vmatpush1.msra.mxu0 0.0
  %838 = vmatprep.subr.mxu0 0.0
  %839 = vmatpush1.msra.mxu0 0.0
  %840 = vmatprep.subr.mxu0 0.0
  %841 = vmatpush1.msra.mxu0 0.0
  %842 = vmatprep.subr.mxu0 0.0
  %843 = vmatpush1.msra.mxu0 0.0
  %844 = vmatprep.subr.mxu0 0.0
  %845 = vmatpush1.msra.mxu0 0.0
  %846 = vmatprep.subr.mxu0 0.0
  %847 = vmatpush1.msra.mxu0 0.0
  %848 = vmatprep.subr.mxu0 0.0
  %849 = vmatpush1.msra.mxu0 0.0
  %850 = vmatprep.subr.mxu0 0.0
  %851 = vmatpush1.msra.mxu0 0.0
  %852 = vmatprep.subr.mxu0 0.0
  %853 = vmatpush1.msra.mxu0 0.0
  %854 = vmatprep.subr.mxu0 0.0
  %855 = vmatpush1.msra.mxu0 0.0
  %856 = vmatprep.subr.mxu0 0.0
  %857 = vmatpush1.msra.mxu0 0.0
  %858 = vmatprep.subr.mxu0 0.0
  %859 = vmatpush1.msra.mxu0 0.0
  %860 = vmatprep.subr.mxu0 0.0
  %861 = vmatpush1.msra.mxu0 0.0
  %862 = vmatprep.subr.mxu0 0.0
  %863 = vmatpush1.msra.mxu0 0.0
  %864 = vmatprep.subr.mxu0 0.0
  %865 = vmatpush1.msra.mxu0 0.0
  %866 = vmatprep.subr.mxu0 0.0
  %867 = vmatpush1.msra.mxu0 0.0
  %868 = vmatprep.subr.mxu0 0.0
  %869 = vmatpush1.msra.mxu0 0.0
  %870 = vmatprep.subr.mxu0 0.0
  %871 = vmatpush1.msra.mxu0 0.0
  %872 = vmatprep.subr.mxu0 0.0
  %873 = vmatpush1.msra.mxu0 0.0
  %874 = vmatprep.subr.mxu0 0.0
  %875 = vmatpush1.msra.mxu0 0.0
  %876 = vmatprep.subr.mxu0 0.0
  %877 = vmatpush1.msra.mxu0 0.0
  %878 = vmatprep.subr.mxu0 0.0
  %879 = vmatpush1.msra.mxu0 0.0
  %880 = vmatprep.subr.mxu0 0.0
  %881 = vmatpush1.msra.mxu0 0.0
  %882 = vmatprep.mubr.f32.mxu0 0.0
  %883 = vmatmul.mubr.f32.gmra.mrb[0].mxu0 %v816
  %v884 = vpop.f32.mrb[0].mxu0
  %v885 = vadd.f32 0.0, %v884
  %v886 = vpop.f32.mrb[0].mxu0
  %887 = vdwg.mxu0
  %v888 = vadd.f32 %v815, %v885
  %v889 = vxor.u32 %v888, 2147483648
  %v890 = vmul.f32 %v889, 1.442695
  %v891 = vpow.pop %v890
  %v892 = vadd.f32 %v891, 1.0
  %v893 = vrcp.pop %v892
  %v894 = vmul.f32 1.0, %v893
  %v895 = vtanh.pop %v888
  %v896 = vmul.f32 %v894, %v803
  %898 = vrot.lane.b32.xlu0 %v895, 64
  %v899 = vpop.permute.xlu0 %898
  %v901 = vmul.f32 %v894, %v899
  %903 = vrot.lane.b32.xlu0 %v901, 32
  %v904 = vpop.permute.xlu0 %903
  %v906 = vadd.f32 %v896, %v904
  %v907 = vtanh.pop %v906
  %909 = vrot.lane.b32.xlu0 %v907, 64
  %v910 = vpop.permute.xlu0 %909
  %v912 = vmul.f32 %v894, %v910
  %914 = vrot.lane.b32.xlu0 %v912, 32
  %v915 = vpop.permute.xlu0 %914
  %917 = vst.msk [vmem:[#allocation2 + $0x30] sm:$0xff] %vm54, %v915
  %v918 = vld [vmem:[#allocation3 + $0x38] sm:$0xff]
  %v919 = vsel %vm54, %v915, 0
  %921 = vmatprep.subr.mxu0 0.0
  %922 = vmatpush1.msra.mxu0 %v192
  %923 = vmatprep.subr.mxu0 0.0
  %924 = vmatpush1.msra.mxu0 %v193
  %925 = vmatprep.subr.mxu0 0.0
  %926 = vmatpush1.msra.mxu0 %v194
  %927 = vmatprep.subr.mxu0 0.0
  %928 = vmatpush1.msra.mxu0 %v195
  %929 = vmatprep.subr.mxu0 0.0
  %930 = vmatpush1.msra.mxu0 0.0
  %931 = vmatprep.subr.mxu0 0.0
  %932 = vmatpush1.msra.mxu0 0.0
  %933 = vmatprep.subr.mxu0 0.0
  %934 = vmatpush1.msra.mxu0 0.0
  %935 = vmatprep.subr.mxu0 0.0
  %936 = vmatpush1.msra.mxu0 0.0
  %937 = vmatprep.subr.mxu0 0.0
  %938 = vmatpush1.msra.mxu0 0.0
  %939 = vmatprep.subr.mxu0 0.0
  %940 = vmatpush1.msra.mxu0 0.0
  %941 = vmatprep.subr.mxu0 0.0
  %942 = vmatpush1.msra.mxu0 0.0
  %943 = vmatprep.subr.mxu0 0.0
  %944 = vmatpush1.msra.mxu0 0.0
  %945 = vmatprep.subr.mxu0 0.0
  %946 = vmatpush1.msra.mxu0 0.0
  %947 = vmatprep.subr.mxu0 0.0
  %948 = vmatpush1.msra.mxu0 0.0
  %949 = vmatprep.subr.mxu0 0.0
  %950 = vmatpush1.msra.mxu0 0.0
  %951 = vmatprep.subr.mxu0 0.0
  %952 = vmatpush1.msra.mxu0 0.0
  %953 = vmatprep.subr.mxu0 0.0
  %954 = vmatpush1.msra.mxu0 0.0
  %955 = vmatprep.subr.mxu0 0.0
  %956 = vmatpush1.msra.mxu0 0.0
  %957 = vmatprep.subr.mxu0 0.0
  %958 = vmatpush1.msra.mxu0 0.0
  %959 = vmatprep.subr.mxu0 0.0
  %960 = vmatpush1.msra.mxu0 0.0
  %961 = vmatprep.subr.mxu0 0.0
  %962 = vmatpush1.msra.mxu0 0.0
  %963 = vmatprep.subr.mxu0 0.0
  %964 = vmatpush1.msra.mxu0 0.0
  %965 = vmatprep.subr.mxu0 0.0
  %966 = vmatpush1.msra.mxu0 0.0
  %967 = vmatprep.subr.mxu0 0.0
  %968 = vmatpush1.msra.mxu0 0.0
  %969 = vmatprep.subr.mxu0 0.0
  %970 = vmatpush1.msra.mxu0 0.0
  %971 = vmatprep.subr.mxu0 0.0
  %972 = vmatpush1.msra.mxu0 0.0
  %973 = vmatprep.subr.mxu0 0.0
  %974 = vmatpush1.msra.mxu0 0.0
  %975 = vmatprep.subr.mxu0 0.0
  %976 = vmatpush1.msra.mxu0 0.0
  %977 = vmatprep.subr.mxu0 0.0
  %978 = vmatpush1.msra.mxu0 0.0
  %979 = vmatprep.subr.mxu0 0.0
  %980 = vmatpush1.msra.mxu0 0.0
  %981 = vmatprep.subr.mxu0 0.0
  %982 = vmatpush1.msra.mxu0 0.0
  %983 = vmatprep.subr.mxu0 0.0
  %984 = vmatpush1.msra.mxu0 0.0
  %985 = vmatprep.mubr.f32.mxu0 0.0
  %986 = vmatmul.mubr.f32.gmra.mrb[0].mxu0 %v919
  %v987 = vpop.f32.mrb[0].mxu0
  %v988 = vadd.f32 0.0, %v987
  %v989 = vpop.f32.mrb[0].mxu0
  %990 = vdwg.mxu0
  %v991 = vadd.f32 %v918, %v988
  %v992 = vxor.u32 %v991, 2147483648
  %v993 = vmul.f32 %v992, 1.442695
  %v994 = vpow.pop %v993
  %v995 = vadd.f32 %v994, 1.0
  %v996 = vrcp.pop %v995
  %v997 = vmul.f32 1.0, %v996
  %v998 = vtanh.pop %v991
  %v999 = vmul.f32 %v997, %v906
  %1001 = vrot.lane.b32.xlu0 %v998, 64
  %v1002 = vpop.permute.xlu0 %1001
  %v1004 = vmul.f32 %v997, %v1002
  %1006 = vrot.lane.b32.xlu0 %v1004, 32
  %v1007 = vpop.permute.xlu0 %1006
  %v1009 = vadd.f32 %v999, %v1007
  %v1010 = vtanh.pop %v1009
  %1012 = vrot.lane.b32.xlu0 %v1010, 64
  %v1013 = vpop.permute.xlu0 %1012
  %v1015 = vmul.f32 %v997, %v1013
  %1017 = vrot.lane.b32.xlu0 %v1015, 32
  %v1018 = vpop.permute.xlu0 %1017
  %1020 = vst.msk [vmem:[#allocation2 + $0x38] sm:$0xff] %vm54, %v1018
  %1021 = vst.msk [vmem:[%s10] sm:$0xff] %vm54, %v1018
  %1023 = vrot.lane.b32.xlu0 %v1009, 96
  %v1024 = vpop.permute.xlu0 %1023
  %1026 = vst.msk [vmem:[%s11] sm:$0xff] %vm54, %v1024
  %v1027 = vld [vmem:[#allocation2] sm:$0xff]
  %v1028 = vld [vmem:[#allocation2 + $0x8] sm:$0xff]
  %v1029 = vld [vmem:[#allocation2 + $0x10] sm:$0xff]
  %v1030 = vld [vmem:[#allocation2 + $0x18] sm:$0xff]
  %v1031 = vld [vmem:[#allocation2 + $0x20] sm:$0xff]
  %v1032 = vld [vmem:[#allocation2 + $0x28] sm:$0xff]
  %v1033 = vld [vmem:[#allocation2 + $0x30] sm:$0xff]
  %v1034 = vld [vmem:[#allocation2 + $0x38] sm:$0xff]
  %v1035 = vld [vmem:[%s4] sm:$0xff]
  %v1036 = vld [vmem:[%s4 + $0x8] sm:$0xff]
  %v1037 = vld [vmem:[%s4 + $0x10] sm:$0xff]
  %v1038 = vld [vmem:[%s4 + $0x18] sm:$0xff]
  %v1039 = vld [vmem:[%s6] sm:$0x1]
  %v1041 = vlaneseq
  %v1042 = vshrl.u32 %v1041, 7
  %v1043 = vsub.s32 0, %v1042
  %v1044 = vrot.slane %v1039, %v1043
  %v1047 = vsel %vm54, %v1027, 0
  %v1050 = vsel %vm54, %v1028, 0
  %v1053 = vsel %vm54, %v1029, 0
  %v1056 = vsel %vm54, %v1030, 0
  %v1059 = vsel %vm54, %v1031, 0
  %v1062 = vsel %vm54, %v1032, 0
  %v1065 = vsel %vm54, %v1033, 0
  %v1068 = vsel %vm54, %v1034, 0
  %1070 = vmatprep.subr.mxu0 0.0
  %1071 = vmatpush1.msra.mxu0 %v1035
  %1072 = vmatprep.subr.mxu0 0.0
  %1073 = vmatpush1.msra.mxu0 %v1036
  %1074 = vmatprep.subr.mxu0 0.0
  %1075 = vmatpush1.msra.mxu0 %v1037
  %1076 = vmatprep.subr.mxu0 0.0
  %1077 = vmatpush1.msra.mxu0 %v1038
  %1078 = vmatprep.subr.mxu0 0.0
  %1079 = vmatpush1.msra.mxu0 0.0
  %1080 = vmatprep.subr.mxu0 0.0
  %1081 = vmatpush1.msra.mxu0 0.0
  %1082 = vmatprep.subr.mxu0 0.0
  %1083 = vmatpush1.msra.mxu0 0.0
  %1084 = vmatprep.subr.mxu0 0.0
  %1085 = vmatpush1.msra.mxu0 0.0
  %1086 = vmatprep.subr.mxu0 0.0
  %1087 = vmatpush1.msra.mxu0 0.0
  %1088 = vmatprep.subr.mxu0 0.0
  %1089 = vmatpush1.msra.mxu0 0.0
  %1090 = vmatprep.subr.mxu0 0.0
  %1091 = vmatpush1.msra.mxu0 0.0
  %1092 = vmatprep.subr.mxu0 0.0
  %1093 = vmatpush1.msra.mxu0 0.0
  %1094 = vmatprep.subr.mxu0 0.0
  %1095 = vmatpush1.msra.mxu0 0.0
  %1096 = vmatprep.subr.mxu0 0.0
  %1097 = vmatpush1.msra.mxu0 0.0
  %1098 = vmatprep.subr.mxu0 0.0
  %1099 = vmatpush1.msra.mxu0 0.0
  %1100 = vmatprep.subr.mxu0 0.0
  %1101 = vmatpush1.msra.mxu0 0.0
  %1102 = vmatprep.subr.mxu0 0.0
  %1103 = vmatpush1.msra.mxu0 0.0
  %1104 = vmatprep.subr.mxu0 0.0
  %1105 = vmatpush1.msra.mxu0 0.0
  %1106 = vmatprep.subr.mxu0 0.0
  %1107 = vmatpush1.msra.mxu0 0.0
  %1108 = vmatprep.subr.mxu0 0.0
  %1109 = vmatpush1.msra.mxu0 0.0
  %1110 = vmatprep.subr.mxu0 0.0
  %1111 = vmatpush1.msra.mxu0 0.0
  %1112 = vmatprep.subr.mxu0 0.0
  %1113 = vmatpush1.msra.mxu0 0.0
  %1114 = vmatprep.subr.mxu0 0.0
  %1115 = vmatpush1.msra.mxu0 0.0
  %1116 = vmatprep.subr.mxu0 0.0
  %1117 = vmatpush1.msra.mxu0 0.0
  %1118 = vmatprep.subr.mxu0 0.0
  %1119 = vmatpush1.msra.mxu0 0.0
  %1120 = vmatprep.subr.mxu0 0.0
  %1121 = vmatpush1.msra.mxu0 0.0
  %1122 = vmatprep.subr.mxu0 0.0
  %1123 = vmatpush1.msra.mxu0 0.0
  %1124 = vmatprep.subr.mxu0 0.0
  %1125 = vmatpush1.msra.mxu0 0.0
  %1126 = vmatprep.subr.mxu0 0.0
  %1127 = vmatpush1.msra.mxu0 0.0
  %1128 = vmatprep.subr.mxu0 0.0
  %1129 = vmatpush1.msra.mxu0 0.0
  %1130 = vmatprep.subr.mxu0 0.0
  %1131 = vmatpush1.msra.mxu0 0.0
  %1132 = vmatprep.subr.mxu0 0.0
  %1133 = vmatpush1.msra.mxu0 0.0
  %1134 = vmatprep.mubr.f32.mxu0 0.0
  %1135 = vmatmul.mubr.f32.gmra.mrb[0].mxu0 %v1047
  %v1136 = vpop.f32.mrb[0].mxu0
  %v1137 = vadd.f32 %v1044, %v1136
  %v1138 = vpop.f32.mrb[0].mxu0
  %1139 = vmatprep.mubr.f32.mxu0 0.0
  %1140 = vmatmul.mubr.f32.gmra.mrb[0].mxu0 %v1050
  %v1141 = vpop.f32.mrb[0].mxu0
  %v1142 = vadd.f32 %v1044, %v1141
  %v1143 = vpop.f32.mrb[0].mxu0
  %1144 = vmatprep.mubr.f32.mxu0 0.0
  %1145 = vmatmul.mubr.f32.gmra.mrb[0].mxu0 %v1053
  %v1146 = vpop.f32.mrb[0].mxu0
  %v1147 = vadd.f32 %v1044, %v1146
  %v1148 = vpop.f32.mrb[0].mxu0
  %1149 = vmatprep.mubr.f32.mxu0 0.0
  %1150 = vmatmul.mubr.f32.gmra.mrb[0].mxu0 %v1056
  %v1151 = vpop.f32.mrb[0].mxu0
  %v1152 = vadd.f32 %v1044, %v1151
  %v1153 = vpop.f32.mrb[0].mxu0
  %1154 = vmatprep.mubr.f32.mxu0 0.0
  %1155 = vmatmul.mubr.f32.gmra.mrb[0].mxu0 %v1059
  %v1156 = vpop.f32.mrb[0].mxu0
  %v1157 = vadd.f32 %v1044, %v1156
  %v1158 = vpop.f32.mrb[0].mxu0
  %1159 = vmatprep.mubr.f32.mxu0 0.0
  %1160 = vmatmul.mubr.f32.gmra.mrb[0].mxu0 %v1062
  %v1161 = vpop.f32.mrb[0].mxu0
  %v1162 = vadd.f32 %v1044, %v1161
  %v1163 = vpop.f32.mrb[0].mxu0
  %1164 = vmatprep.mubr.f32.mxu0 0.0
  %1165 = vmatmul.mubr.f32.gmra.mrb[0].mxu0 %v1065
  %v1166 = vpop.f32.mrb[0].mxu0
  %v1167 = vadd.f32 %v1044, %v1166
  %v1168 = vpop.f32.mrb[0].mxu0
  %1169 = vmatprep.mubr.f32.mxu0 0.0
  %1170 = vmatmul.mubr.f32.gmra.mrb[0].mxu0 %v1068
  %v1171 = vpop.f32.mrb[0].mxu0
  %v1172 = vadd.f32 %v1044, %v1171
  %v1173 = vpop.f32.mrb[0].mxu0
  %1174 = vdwg.mxu0
  %1175 = vst [vmem:[#allocation3] sm:$0xff] %v1137
  %1176 = vst [vmem:[#allocation3 + $0x8] sm:$0xff] %v1142
  %1177 = vst [vmem:[#allocation3 + $0x10] sm:$0xff] %v1147
  %1178 = vst [vmem:[#allocation3 + $0x18] sm:$0xff] %v1152
  %1179 = vst [vmem:[#allocation3 + $0x20] sm:$0xff] %v1157
  %1180 = vst [vmem:[#allocation3 + $0x28] sm:$0xff] %v1162
  %1181 = vst [vmem:[#allocation3 + $0x30] sm:$0xff] %v1167
  %1182 = vst [vmem:[#allocation3 + $0x38] sm:$0xff] %v1172
  %v1183 = vld [vmem:[%s5] sm:$0xff]
  %v1184 = vld [vmem:[%s5 + $0x8] sm:$0xff]
  %v1185 = vld [vmem:[%s5 + $0x10] sm:$0xff]
  %v1186 = vld [vmem:[%s5 + $0x18] sm:$0xff]
  %v1187 = vld [vmem:[#allocation3] sm:$0xff]
  %1188 = vmatprep.subr.mxu0 0.0
  %1189 = vmatpush1.msra.mxu0 %v1183
  %1190 = vmatprep.subr.mxu0 0.0
  %1191 = vmatpush1.msra.mxu0 %v1184
  %1192 = vmatprep.subr.mxu0 0.0
  %1193 = vmatpush1.msra.mxu0 %v1185
  %1194 = vmatprep.subr.mxu0 0.0
  %1195 = vmatpush1.msra.mxu0 %v1186
  %1196 = vmatprep.subr.mxu0 0.0
  %1197 = vmatpush1.msra.mxu0 0.0
  %1198 = vmatprep.subr.mxu0 0.0
  %1199 = vmatpush1.msra.mxu0 0.0
  %1200 = vmatprep.subr.mxu0 0.0
  %1201 = vmatpush1.msra.mxu0 0.0
  %1202 = vmatprep.subr.mxu0 0.0
  %1203 = vmatpush1.msra.mxu0 0.0
  %1204 = vmatprep.subr.mxu0 0.0
  %1205 = vmatpush1.msra.mxu0 0.0
  %1206 = vmatprep.subr.mxu0 0.0
  %1207 = vmatpush1.msra.mxu0 0.0
  %1208 = vmatprep.subr.mxu0 0.0
  %1209 = vmatpush1.msra.mxu0 0.0
  %1210 = vmatprep.subr.mxu0 0.0
  %1211 = vmatpush1.msra.mxu0 0.0
  %1212 = vmatprep.subr.mxu0 0.0
  %1213 = vmatpush1.msra.mxu0 0.0
  %1214 = vmatprep.subr.mxu0 0.0
  %1215 = vmatpush1.msra.mxu0 0.0
  %1216 = vmatprep.subr.mxu0 0.0
  %1217 = vmatpush1.msra.mxu0 0.0
  %1218 = vmatprep.subr.mxu0 0.0
  %1219 = vmatpush1.msra.mxu0 0.0
  %1220 = vmatprep.subr.mxu0 0.0
  %1221 = vmatpush1.msra.mxu0 0.0
  %1222 = vmatprep.subr.mxu0 0.0
  %1223 = vmatpush1.msra.mxu0 0.0
  %1224 = vmatprep.subr.mxu0 0.0
  %1225 = vmatpush1.msra.mxu0 0.0
  %1226 = vmatprep.subr.mxu0 0.0
  %1227 = vmatpush1.msra.mxu0 0.0
  %1228 = vmatprep.subr.mxu0 0.0
  %1229 = vmatpush1.msra.mxu0 0.0
  %1230 = vmatprep.subr.mxu0 0.0
  %1231 = vmatpush1.msra.mxu0 0.0
  %1232 = vmatprep.subr.mxu0 0.0
  %1233 = vmatpush1.msra.mxu0 0.0
  %1234 = vmatprep.subr.mxu0 0.0
  %1235 = vmatpush1.msra.mxu0 0.0
  %1236 = vmatprep.subr.mxu0 0.0
  %1237 = vmatpush1.msra.mxu0 0.0
  %1238 = vmatprep.subr.mxu0 0.0
  %1239 = vmatpush1.msra.mxu0 0.0
  %1240 = vmatprep.subr.mxu0 0.0
  %1241 = vmatpush1.msra.mxu0 0.0
  %1242 = vmatprep.subr.mxu0 0.0
  %1243 = vmatpush1.msra.mxu0 0.0
  %1244 = vmatprep.subr.mxu0 0.0
  %1245 = vmatpush1.msra.mxu0 0.0
  %1246 = vmatprep.subr.mxu0 0.0
  %1247 = vmatpush1.msra.mxu0 0.0
  %1248 = vmatprep.subr.mxu0 0.0
  %1249 = vmatpush1.msra.mxu0 0.0
  %1250 = vmatprep.subr.mxu0 0.0
  %1251 = vmatpush1.msra.mxu0 0.0
  %1252 = vmatprep.mubr.f32.mxu0 0.0
  %1253 = vmatmul.mubr.f32.gmra.mrb[0].mxu0 %v198
  %v1254 = vpop.f32.mrb[0].mxu0
  %v1255 = vadd.f32 0.0, %v1254
  %v1256 = vpop.f32.mrb[0].mxu0
  %1257 = vdwg.mxu0
  %v1258 = vadd.f32 %v1187, %v1255
  %v1259 = vxor.u32 %v1258, 2147483648
  %v1260 = vmul.f32 %v1259, 1.442695
  %v1261 = vpow.pop %v1260
  %v1262 = vadd.f32 %v1261, 1.0
  %v1263 = vrcp.pop %v1262
  %v1264 = vmul.f32 1.0, %v1263
  %v1265 = vtanh.pop %v1258
  %v1266 = vmul.f32 %v1264, 0.0
  %1268 = vrot.lane.b32.xlu0 %v1265, 64
  %v1269 = vpop.permute.xlu0 %1268
  %v1271 = vmul.f32 %v1264, %v1269
  %1273 = vrot.lane.b32.xlu0 %v1271, 32
  %v1274 = vpop.permute.xlu0 %1273
  %v1276 = vadd.f32 %v1266, %v1274
  %v1277 = vtanh.pop %v1276
  %1279 = vrot.lane.b32.xlu0 %v1277, 64
  %v1280 = vpop.permute.xlu0 %1279
  %v1282 = vmul.f32 %v1264, %v1280
  %1284 = vrot.lane.b32.xlu0 %v1282, 32
  %v1285 = vpop.permute.xlu0 %1284
  %1287 = vst.msk [vmem:[#allocation2] sm:$0xff] %vm54, %v1285
  %v1288 = vld [vmem:[#allocation3 + $0x8] sm:$0xff]
  %v1289 = vsel %vm54, %v1285, 0
  %1291 = vmatprep.subr.mxu0 0.0
  %1292 = vmatpush1.msra.mxu0 %v1183
  %1293 = vmatprep.subr.mxu0 0.0
  %1294 = vmatpush1.msra.mxu0 %v1184
  %1295 = vmatprep.subr.mxu0 0.0
  %1296 = vmatpush1.msra.mxu0 %v1185
  %1297 = vmatprep.subr.mxu0 0.0
  %1298 = vmatpush1.msra.mxu0 %v1186
  %1299 = vmatprep.subr.mxu0 0.0
  %1300 = vmatpush1.msra.mxu0 0.0
  %1301 = vmatprep.subr.mxu0 0.0
  %1302 = vmatpush1.msra.mxu0 0.0
  %1303 = vmatprep.subr.mxu0 0.0
  %1304 = vmatpush1.msra.mxu0 0.0
  %1305 = vmatprep.subr.mxu0 0.0
  %1306 = vmatpush1.msra.mxu0 0.0
  %1307 = vmatprep.subr.mxu0 0.0
  %1308 = vmatpush1.msra.mxu0 0.0
  %1309 = vmatprep.subr.mxu0 0.0
  %1310 = vmatpush1.msra.mxu0 0.0
  %1311 = vmatprep.subr.mxu0 0.0
  %1312 = vmatpush1.msra.mxu0 0.0
  %1313 = vmatprep.subr.mxu0 0.0
  %1314 = vmatpush1.msra.mxu0 0.0
  %1315 = vmatprep.subr.mxu0 0.0
  %1316 = vmatpush1.msra.mxu0 0.0
  %1317 = vmatprep.subr.mxu0 0.0
  %1318 = vmatpush1.msra.mxu0 0.0
  %1319 = vmatprep.subr.mxu0 0.0
  %1320 = vmatpush1.msra.mxu0 0.0
  %1321 = vmatprep.subr.mxu0 0.0
  %1322 = vmatpush1.msra.mxu0 0.0
  %1323 = vmatprep.subr.mxu0 0.0
  %1324 = vmatpush1.msra.mxu0 0.0
  %1325 = vmatprep.subr.mxu0 0.0
  %1326 = vmatpush1.msra.mxu0 0.0
  %1327 = vmatprep.subr.mxu0 0.0
  %1328 = vmatpush1.msra.mxu0 0.0
  %1329 = vmatprep.subr.mxu0 0.0
  %1330 = vmatpush1.msra.mxu0 0.0
  %1331 = vmatprep.subr.mxu0 0.0
  %1332 = vmatpush1.msra.mxu0 0.0
  %1333 = vmatprep.subr.mxu0 0.0
  %1334 = vmatpush1.msra.mxu0 0.0
  %1335 = vmatprep.subr.mxu0 0.0
  %1336 = vmatpush1.msra.mxu0 0.0
  %1337 = vmatprep.subr.mxu0 0.0
  %1338 = vmatpush1.msra.mxu0 0.0
  %1339 = vmatprep.subr.mxu0 0.0
  %1340 = vmatpush1.msra.mxu0 0.0
  %1341 = vmatprep.subr.mxu0 0.0
  %1342 = vmatpush1.msra.mxu0 0.0
  %1343 = vmatprep.subr.mxu0 0.0
  %1344 = vmatpush1.msra.mxu0 0.0
  %1345 = vmatprep.subr.mxu0 0.0
  %1346 = vmatpush1.msra.mxu0 0.0
  %1347 = vmatprep.subr.mxu0 0.0
  %1348 = vmatpush1.msra.mxu0 0.0
  %1349 = vmatprep.subr.mxu0 0.0
  %1350 = vmatpush1.msra.mxu0 0.0
  %1351 = vmatprep.subr.mxu0 0.0
  %1352 = vmatpush1.msra.mxu0 0.0
  %1353 = vmatprep.subr.mxu0 0.0
  %1354 = vmatpush1.msra.mxu0 0.0
  %1355 = vmatprep.mubr.f32.mxu0 0.0
  %1356 = vmatmul.mubr.f32.gmra.mrb[0].mxu0 %v1289
  %v1357 = vpop.f32.mrb[0].mxu0
  %v1358 = vadd.f32 0.0, %v1357
  %v1359 = vpop.f32.mrb[0].mxu0
  %1360 = vdwg.mxu0
  %v1361 = vadd.f32 %v1288, %v1358
  %v1362 = vxor.u32 %v1361, 2147483648
  %v1363 = vmul.f32 %v1362, 1.442695
  %v1364 = vpow.pop %v1363
  %v1365 = vadd.f32 %v1364, 1.0
  %v1366 = vrcp.pop %v1365
  %v1367 = vmul.f32 1.0, %v1366
  %v1368 = vtanh.pop %v1361
  %v1369 = vmul.f32 %v1367, %v1276
  %1371 = vrot.lane.b32.xlu0 %v1368, 64
  %v1372 = vpop.permute.xlu0 %1371
  %v1374 = vmul.f32 %v1367, %v1372
  %1376 = vrot.lane.b32.xlu0 %v1374, 32
  %v1377 = vpop.permute.xlu0 %1376
  %v1379 = vadd.f32 %v1369, %v1377
  %v1380 = vtanh.pop %v1379
  %1382 = vrot.lane.b32.xlu0 %v1380, 64
  %v1383 = vpop.permute.xlu0 %1382
  %v1385 = vmul.f32 %v1367, %v1383
  %1387 = vrot.lane.b32.xlu0 %v1385, 32
  %v1388 = vpop.permute.xlu0 %1387
  %1390 = vst.msk [vmem:[#allocation2 + $0x8] sm:$0xff] %vm54, %v1388
  %v1391 = vld [vmem:[#allocation3 + $0x10] sm:$0xff]
  %v1392 = vsel %vm54, %v1388, 0
  %1394 = vmatprep.subr.mxu0 0.0
  %1395 = vmatpush1.msra.mxu0 %v1183
  %1396 = vmatprep.subr.mxu0 0.0
  %1397 = vmatpush1.msra.mxu0 %v1184
  %1398 = vmatprep.subr.mxu0 0.0
  %1399 = vmatpush1.msra.mxu0 %v1185
  %1400 = vmatprep.subr.mxu0 0.0
  %1401 = vmatpush1.msra.mxu0 %v1186
  %1402 = vmatprep.subr.mxu0 0.0
  %1403 = vmatpush1.msra.mxu0 0.0
  %1404 = vmatprep.subr.mxu0 0.0
  %1405 = vmatpush1.msra.mxu0 0.0
  %1406 = vmatprep.subr.mxu0 0.0
  %1407 = vmatpush1.msra.mxu0 0.0
  %1408 = vmatprep.subr.mxu0 0.0
  %1409 = vmatpush1.msra.mxu0 0.0
  %1410 = vmatprep.subr.mxu0 0.0
  %1411 = vmatpush1.msra.mxu0 0.0
  %1412 = vmatprep.subr.mxu0 0.0
  %1413 = vmatpush1.msra.mxu0 0.0
  %1414 = vmatprep.subr.mxu0 0.0
  %1415 = vmatpush1.msra.mxu0 0.0
  %1416 = vmatprep.subr.mxu0 0.0
  %1417 = vmatpush1.msra.mxu0 0.0
  %1418 = vmatprep.subr.mxu0 0.0
  %1419 = vmatpush1.msra.mxu0 0.0
  %1420 = vmatprep.subr.mxu0 0.0
  %1421 = vmatpush1.msra.mxu0 0.0
  %1422 = vmatprep.subr.mxu0 0.0
  %1423 = vmatpush1.msra.mxu0 0.0
  %1424 = vmatprep.subr.mxu0 0.0
  %1425 = vmatpush1.msra.mxu0 0.0
  %1426 = vmatprep.subr.mxu0 0.0
  %1427 = vmatpush1.msra.mxu0 0.0
  %1428 = vmatprep.subr.mxu0 0.0
  %1429 = vmatpush1.msra.mxu0 0.0
  %1430 = vmatprep.subr.mxu0 0.0
  %1431 = vmatpush1.msra.mxu0 0.0
  %1432 = vmatprep.subr.mxu0 0.0
  %1433 = vmatpush1.msra.mxu0 0.0
  %1434 = vmatprep.subr.mxu0 0.0
  %1435 = vmatpush1.msra.mxu0 0.0
  %1436 = vmatprep.subr.mxu0 0.0
  %1437 = vmatpush1.msra.mxu0 0.0
  %1438 = vmatprep.subr.mxu0 0.0
  %1439 = vmatpush1.msra.mxu0 0.0
  %1440 = vmatprep.subr.mxu0 0.0
  %1441 = vmatpush1.msra.mxu0 0.0
  %1442 = vmatprep.subr.mxu0 0.0
  %1443 = vmatpush1.msra.mxu0 0.0
  %1444 = vmatprep.subr.mxu0 0.0
  %1445 = vmatpush1.msra.mxu0 0.0
  %1446 = vmatprep.subr.mxu0 0.0
  %1447 = vmatpush1.msra.mxu0 0.0
  %1448 = vmatprep.subr.mxu0 0.0
  %1449 = vmatpush1.msra.mxu0 0.0
  %1450 = vmatprep.subr.mxu0 0.0
  %1451 = vmatpush1.msra.mxu0 0.0
  %1452 = vmatprep.subr.mxu0 0.0
  %1453 = vmatpush1.msra.mxu0 0.0
  %1454 = vmatprep.subr.mxu0 0.0
  %1455 = vmatpush1.msra.mxu0 0.0
  %1456 = vmatprep.subr.mxu0 0.0
  %1457 = vmatpush1.msra.mxu0 0.0
  %1458 = vmatprep.mubr.f32.mxu0 0.0
  %1459 = vmatmul.mubr.f32.gmra.mrb[0].mxu0 %v1392
  %v1460 = vpop.f32.mrb[0].mxu0
  %v1461 = vadd.f32 0.0, %v1460
  %v1462 = vpop.f32.mrb[0].mxu0
  %1463 = vdwg.mxu0
  %v1464 = vadd.f32 %v1391, %v1461
  %v1465 = vxor.u32 %v1464, 2147483648
  %v1466 = vmul.f32 %v1465, 1.442695
  %v1467 = vpow.pop %v1466
  %v1468 = vadd.f32 %v1467, 1.0
  %v1469 = vrcp.pop %v1468
  %v1470 = vmul.f32 1.0, %v1469
  %v1471 = vtanh.pop %v1464
  %v1472 = vmul.f32 %v1470, %v1379
  %1474 = vrot.lane.b32.xlu0 %v1471, 64
  %v1475 = vpop.permute.xlu0 %1474
  %v1477 = vmul.f32 %v1470, %v1475
  %1479 = vrot.lane.b32.xlu0 %v1477, 32
  %v1480 = vpop.permute.xlu0 %1479
  %v1482 = vadd.f32 %v1472, %v1480
  %v1483 = vtanh.pop %v1482
  %1485 = vrot.lane.b32.xlu0 %v1483, 64
  %v1486 = vpop.permute.xlu0 %1485
  %v1488 = vmul.f32 %v1470, %v1486
  %1490 = vrot.lane.b32.xlu0 %v1488, 32
  %v1491 = vpop.permute.xlu0 %1490
  %1493 = vst.msk [vmem:[#allocation2 + $0x10] sm:$0xff] %vm54, %v1491
  %v1494 = vld [vmem:[#allocation3 + $0x18] sm:$0xff]
  %v1495 = vsel %vm54, %v1491, 0
  %1497 = vmatprep.subr.mxu0 0.0
  %1498 = vmatpush1.msra.mxu0 %v1183
  %1499 = vmatprep.subr.mxu0 0.0
  %1500 = vmatpush1.msra.mxu0 %v1184
  %1501 = vmatprep.subr.mxu0 0.0
  %1502 = vmatpush1.msra.mxu0 %v1185
  %1503 = vmatprep.subr.mxu0 0.0
  %1504 = vmatpush1.msra.mxu0 %v1186
  %1505 = vmatprep.subr.mxu0 0.0
  %1506 = vmatpush1.msra.mxu0 0.0
  %1507 = vmatprep.subr.mxu0 0.0
  %1508 = vmatpush1.msra.mxu0 0.0
  %1509 = vmatprep.subr.mxu0 0.0
  %1510 = vmatpush1.msra.mxu0 0.0
  %1511 = vmatprep.subr.mxu0 0.0
  %1512 = vmatpush1.msra.mxu0 0.0
  %1513 = vmatprep.subr.mxu0 0.0
  %1514 = vmatpush1.msra.mxu0 0.0
  %1515 = vmatprep.subr.mxu0 0.0
  %1516 = vmatpush1.msra.mxu0 0.0
  %1517 = vmatprep.subr.mxu0 0.0
  %1518 = vmatpush1.msra.mxu0 0.0
  %1519 = vmatprep.subr.mxu0 0.0
  %1520 = vmatpush1.msra.mxu0 0.0
  %1521 = vmatprep.subr.mxu0 0.0
  %1522 = vmatpush1.msra.mxu0 0.0
  %1523 = vmatprep.subr.mxu0 0.0
  %1524 = vmatpush1.msra.mxu0 0.0
  %1525 = vmatprep.subr.mxu0 0.0
  %1526 = vmatpush1.msra.mxu0 0.0
  %1527 = vmatprep.subr.mxu0 0.0
  %1528 = vmatpush1.msra.mxu0 0.0
  %1529 = vmatprep.subr.mxu0 0.0
  %1530 = vmatpush1.msra.mxu0 0.0
  %1531 = vmatprep.subr.mxu0 0.0
  %1532 = vmatpush1.msra.mxu0 0.0
  %1533 = vmatprep.subr.mxu0 0.0
  %1534 = vmatpush1.msra.mxu0 0.0
  %1535 = vmatprep.subr.mxu0 0.0
  %1536 = vmatpush1.msra.mxu0 0.0
  %1537 = vmatprep.subr.mxu0 0.0
  %1538 = vmatpush1.msra.mxu0 0.0
  %1539 = vmatprep.subr.mxu0 0.0
  %1540 = vmatpush1.msra.mxu0 0.0
  %1541 = vmatprep.subr.mxu0 0.0
  %1542 = vmatpush1.msra.mxu0 0.0
  %1543 = vmatprep.subr.mxu0 0.0
  %1544 = vmatpush1.msra.mxu0 0.0
  %1545 = vmatprep.subr.mxu0 0.0
  %1546 = vmatpush1.msra.mxu0 0.0
  %1547 = vmatprep.subr.mxu0 0.0
  %1548 = vmatpush1.msra.mxu0 0.0
  %1549 = vmatprep.subr.mxu0 0.0
  %1550 = vmatpush1.msra.mxu0 0.0
  %1551 = vmatprep.subr.mxu0 0.0
  %1552 = vmatpush1.msra.mxu0 0.0
  %1553 = vmatprep.subr.mxu0 0.0
  %1554 = vmatpush1.msra.mxu0 0.0
  %1555 = vmatprep.subr.mxu0 0.0
  %1556 = vmatpush1.msra.mxu0 0.0
  %1557 = vmatprep.subr.mxu0 0.0
  %1558 = vmatpush1.msra.mxu0 0.0
  %1559 = vmatprep.subr.mxu0 0.0
  %1560 = vmatpush1.msra.mxu0 0.0
  %1561 = vmatprep.mubr.f32.mxu0 0.0
  %1562 = vmatmul.mubr.f32.gmra.mrb[0].mxu0 %v1495
  %v1563 = vpop.f32.mrb[0].mxu0
  %v1564 = vadd.f32 0.0, %v1563
  %v1565 = vpop.f32.mrb[0].mxu0
  %1566 = vdwg.mxu0
  %v1567 = vadd.f32 %v1494, %v1564
  %v1568 = vxor.u32 %v1567, 2147483648
  %v1569 = vmul.f32 %v1568, 1.442695
  %v1570 = vpow.pop %v1569
  %v1571 = vadd.f32 %v1570, 1.0
  %v1572 = vrcp.pop %v1571
  %v1573 = vmul.f32 1.0, %v1572
  %v1574 = vtanh.pop %v1567
  %v1575 = vmul.f32 %v1573, %v1482
  %1577 = vrot.lane.b32.xlu0 %v1574, 64
  %v1578 = vpop.permute.xlu0 %1577
  %v1580 = vmul.f32 %v1573, %v1578
  %1582 = vrot.lane.b32.xlu0 %v1580, 32
  %v1583 = vpop.permute.xlu0 %1582
  %v1585 = vadd.f32 %v1575, %v1583
  %v1586 = vtanh.pop %v1585
  %1588 = vrot.lane.b32.xlu0 %v1586, 64
  %v1589 = vpop.permute.xlu0 %1588
  %v1591 = vmul.f32 %v1573, %v1589
  %1593 = vrot.lane.b32.xlu0 %v1591, 32
  %v1594 = vpop.permute.xlu0 %1593
  %1596 = vst.msk [vmem:[#allocation2 + $0x18] sm:$0xff] %vm54, %v1594
  %v1597 = vld [vmem:[#allocation3 + $0x20] sm:$0xff]
  %v1598 = vsel %vm54, %v1594, 0
  %1600 = vmatprep.subr.mxu0 0.0
  %1601 = vmatpush1.msra.mxu0 %v1183
  %1602 = vmatprep.subr.mxu0 0.0
  %1603 = vmatpush1.msra.mxu0 %v1184
  %1604 = vmatprep.subr.mxu0 0.0
  %1605 = vmatpush1.msra.mxu0 %v1185
  %1606 = vmatprep.subr.mxu0 0.0
  %1607 = vmatpush1.msra.mxu0 %v1186
  %1608 = vmatprep.subr.mxu0 0.0
  %1609 = vmatpush1.msra.mxu0 0.0
  %1610 = vmatprep.subr.mxu0 0.0
  %1611 = vmatpush1.msra.mxu0 0.0
  %1612 = vmatprep.subr.mxu0 0.0
  %1613 = vmatpush1.msra.mxu0 0.0
  %1614 = vmatprep.subr.mxu0 0.0
  %1615 = vmatpush1.msra.mxu0 0.0
  %1616 = vmatprep.subr.mxu0 0.0
  %1617 = vmatpush1.msra.mxu0 0.0
  %1618 = vmatprep.subr.mxu0 0.0
  %1619 = vmatpush1.msra.mxu0 0.0
  %1620 = vmatprep.subr.mxu0 0.0
  %1621 = vmatpush1.msra.mxu0 0.0
  %1622 = vmatprep.subr.mxu0 0.0
  %1623 = vmatpush1.msra.mxu0 0.0
  %1624 = vmatprep.subr.mxu0 0.0
  %1625 = vmatpush1.msra.mxu0 0.0
  %1626 = vmatprep.subr.mxu0 0.0
  %1627 = vmatpush1.msra.mxu0 0.0
  %1628 = vmatprep.subr.mxu0 0.0
  %1629 = vmatpush1.msra.mxu0 0.0
  %1630 = vmatprep.subr.mxu0 0.0
  %1631 = vmatpush1.msra.mxu0 0.0
  %1632 = vmatprep.subr.mxu0 0.0
  %1633 = vmatpush1.msra.mxu0 0.0
  %1634 = vmatprep.subr.mxu0 0.0
  %1635 = vmatpush1.msra.mxu0 0.0
  %1636 = vmatprep.subr.mxu0 0.0
  %1637 = vmatpush1.msra.mxu0 0.0
  %1638 = vmatprep.subr.mxu0 0.0
  %1639 = vmatpush1.msra.mxu0 0.0
  %1640 = vmatprep.subr.mxu0 0.0
  %1641 = vmatpush1.msra.mxu0 0.0
  %1642 = vmatprep.subr.mxu0 0.0
  %1643 = vmatpush1.msra.mxu0 0.0
  %1644 = vmatprep.subr.mxu0 0.0
  %1645 = vmatpush1.msra.mxu0 0.0
  %1646 = vmatprep.subr.mxu0 0.0
  %1647 = vmatpush1.msra.mxu0 0.0
  %1648 = vmatprep.subr.mxu0 0.0
  %1649 = vmatpush1.msra.mxu0 0.0
  %1650 = vmatprep.subr.mxu0 0.0
  %1651 = vmatpush1.msra.mxu0 0.0
  %1652 = vmatprep.subr.mxu0 0.0
  %1653 = vmatpush1.msra.mxu0 0.0
  %1654 = vmatprep.subr.mxu0 0.0
  %1655 = vmatpush1.msra.mxu0 0.0
  %1656 = vmatprep.subr.mxu0 0.0
  %1657 = vmatpush1.msra.mxu0 0.0
  %1658 = vmatprep.subr.mxu0 0.0
  %1659 = vmatpush1.msra.mxu0 0.0
  %1660 = vmatprep.subr.mxu0 0.0
  %1661 = vmatpush1.msra.mxu0 0.0
  %1662 = vmatprep.subr.mxu0 0.0
  %1663 = vmatpush1.msra.mxu0 0.0
  %1664 = vmatprep.mubr.f32.mxu0 0.0
  %1665 = vmatmul.mubr.f32.gmra.mrb[0].mxu0 %v1598
  %v1666 = vpop.f32.mrb[0].mxu0
  %v1667 = vadd.f32 0.0, %v1666
  %v1668 = vpop.f32.mrb[0].mxu0
  %1669 = vdwg.mxu0
  %v1670 = vadd.f32 %v1597, %v1667
  %v1671 = vxor.u32 %v1670, 2147483648
  %v1672 = vmul.f32 %v1671, 1.442695
  %v1673 = vpow.pop %v1672
  %v1674 = vadd.f32 %v1673, 1.0
  %v1675 = vrcp.pop %v1674
  %v1676 = vmul.f32 1.0, %v1675
  %v1677 = vtanh.pop %v1670
  %v1678 = vmul.f32 %v1676, %v1585
  %1680 = vrot.lane.b32.xlu0 %v1677, 64
  %v1681 = vpop.permute.xlu0 %1680
  %v1683 = vmul.f32 %v1676, %v1681
  %1685 = vrot.lane.b32.xlu0 %v1683, 32
  %v1686 = vpop.permute.xlu0 %1685
  %v1688 = vadd.f32 %v1678, %v1686
  %v1689 = vtanh.pop %v1688
  %1691 = vrot.lane.b32.xlu0 %v1689, 64
  %v1692 = vpop.permute.xlu0 %1691
  %v1694 = vmul.f32 %v1676, %v1692
  %1696 = vrot.lane.b32.xlu0 %v1694, 32
  %v1697 = vpop.permute.xlu0 %1696
  %1699 = vst.msk [vmem:[#allocation2 + $0x20] sm:$0xff] %vm54, %v1697
  %v1700 = vld [vmem:[#allocation3 + $0x28] sm:$0xff]
  %v1701 = vsel %vm54, %v1697, 0
  %1703 = vmatprep.subr.mxu0 0.0
  %1704 = vmatpush1.msra.mxu0 %v1183
  %1705 = vmatprep.subr.mxu0 0.0
  %1706 = vmatpush1.msra.mxu0 %v1184
  %1707 = vmatprep.subr.mxu0 0.0
  %1708 = vmatpush1.msra.mxu0 %v1185
  %1709 = vmatprep.subr.mxu0 0.0
  %1710 = vmatpush1.msra.mxu0 %v1186
  %1711 = vmatprep.subr.mxu0 0.0
  %1712 = vmatpush1.msra.mxu0 0.0
  %1713 = vmatprep.subr.mxu0 0.0
  %1714 = vmatpush1.msra.mxu0 0.0
  %1715 = vmatprep.subr.mxu0 0.0
  %1716 = vmatpush1.msra.mxu0 0.0
  %1717 = vmatprep.subr.mxu0 0.0
  %1718 = vmatpush1.msra.mxu0 0.0
  %1719 = vmatprep.subr.mxu0 0.0
  %1720 = vmatpush1.msra.mxu0 0.0
  %1721 = vmatprep.subr.mxu0 0.0
  %1722 = vmatpush1.msra.mxu0 0.0
  %1723 = vmatprep.subr.mxu0 0.0
  %1724 = vmatpush1.msra.mxu0 0.0
  %1725 = vmatprep.subr.mxu0 0.0
  %1726 = vmatpush1.msra.mxu0 0.0
  %1727 = vmatprep.subr.mxu0 0.0
  %1728 = vmatpush1.msra.mxu0 0.0
  %1729 = vmatprep.subr.mxu0 0.0
  %1730 = vmatpush1.msra.mxu0 0.0
  %1731 = vmatprep.subr.mxu0 0.0
  %1732 = vmatpush1.msra.mxu0 0.0
  %1733 = vmatprep.subr.mxu0 0.0
  %1734 = vmatpush1.msra.mxu0 0.0
  %1735 = vmatprep.subr.mxu0 0.0
  %1736 = vmatpush1.msra.mxu0 0.0
  %1737 = vmatprep.subr.mxu0 0.0
  %1738 = vmatpush1.msra.mxu0 0.0
  %1739 = vmatprep.subr.mxu0 0.0
  %1740 = vmatpush1.msra.mxu0 0.0
  %1741 = vmatprep.subr.mxu0 0.0
  %1742 = vmatpush1.msra.mxu0 0.0
  %1743 = vmatprep.subr.mxu0 0.0
  %1744 = vmatpush1.msra.mxu0 0.0
  %1745 = vmatprep.subr.mxu0 0.0
  %1746 = vmatpush1.msra.mxu0 0.0
  %1747 = vmatprep.subr.mxu0 0.0
  %1748 = vmatpush1.msra.mxu0 0.0
  %1749 = vmatprep.subr.mxu0 0.0
  %1750 = vmatpush1.msra.mxu0 0.0
  %1751 = vmatprep.subr.mxu0 0.0
  %1752 = vmatpush1.msra.mxu0 0.0
  %1753 = vmatprep.subr.mxu0 0.0
  %1754 = vmatpush1.msra.mxu0 0.0
  %1755 = vmatprep.subr.mxu0 0.0
  %1756 = vmatpush1.msra.mxu0 0.0
  %1757 = vmatprep.subr.mxu0 0.0
  %1758 = vmatpush1.msra.mxu0 0.0
  %1759 = vmatprep.subr.mxu0 0.0
  %1760 = vmatpush1.msra.mxu0 0.0
  %1761 = vmatprep.subr.mxu0 0.0
  %1762 = vmatpush1.msra.mxu0 0.0
  %1763 = vmatprep.subr.mxu0 0.0
  %1764 = vmatpush1.msra.mxu0 0.0
  %1765 = vmatprep.subr.mxu0 0.0
  %1766 = vmatpush1.msra.mxu0 0.0
  %1767 = vmatprep.mubr.f32.mxu0 0.0
  %1768 = vmatmul.mubr.f32.gmra.mrb[0].mxu0 %v1701
  %v1769 = vpop.f32.mrb[0].mxu0
  %v1770 = vadd.f32 0.0, %v1769
  %v1771 = vpop.f32.mrb[0].mxu0
  %1772 = vdwg.mxu0
  %v1773 = vadd.f32 %v1700, %v1770
  %v1774 = vxor.u32 %v1773, 2147483648
  %v1775 = vmul.f32 %v1774, 1.442695
  %v1776 = vpow.pop %v1775
  %v1777 = vadd.f32 %v1776, 1.0
  %v1778 = vrcp.pop %v1777
  %v1779 = vmul.f32 1.0, %v1778
  %v1780 = vtanh.pop %v1773
  %v1781 = vmul.f32 %v1779, %v1688
  %1783 = vrot.lane.b32.xlu0 %v1780, 64
  %v1784 = vpop.permute.xlu0 %1783
  %v1786 = vmul.f32 %v1779, %v1784
  %1788 = vrot.lane.b32.xlu0 %v1786, 32
  %v1789 = vpop.permute.xlu0 %1788
  %v1791 = vadd.f32 %v1781, %v1789
  %v1792 = vtanh.pop %v1791
  %1794 = vrot.lane.b32.xlu0 %v1792, 64
  %v1795 = vpop.permute.xlu0 %1794
  %v1797 = vmul.f32 %v1779, %v1795
  %1799 = vrot.lane.b32.xlu0 %v1797, 32
  %v1800 = vpop.permute.xlu0 %1799
  %1802 = vst.msk [vmem:[#allocation2 + $0x28] sm:$0xff] %vm54, %v1800
  %v1803 = vld [vmem:[#allocation3 + $0x30] sm:$0xff]
  %v1804 = vsel %vm54, %v1800, 0
  %1806 = vmatprep.subr.mxu0 0.0
  %1807 = vmatpush1.msra.mxu0 %v1183
  %1808 = vmatprep.subr.mxu0 0.0
  %1809 = vmatpush1.msra.mxu0 %v1184
  %1810 = vmatprep.subr.mxu0 0.0
  %1811 = vmatpush1.msra.mxu0 %v1185
  %1812 = vmatprep.subr.mxu0 0.0
  %1813 = vmatpush1.msra.mxu0 %v1186
  %1814 = vmatprep.subr.mxu0 0.0
  %1815 = vmatpush1.msra.mxu0 0.0
  %1816 = vmatprep.subr.mxu0 0.0
  %1817 = vmatpush1.msra.mxu0 0.0
  %1818 = vmatprep.subr.mxu0 0.0
  %1819 = vmatpush1.msra.mxu0 0.0
  %1820 = vmatprep.subr.mxu0 0.0
  %1821 = vmatpush1.msra.mxu0 0.0
  %1822 = vmatprep.subr.mxu0 0.0
  %1823 = vmatpush1.msra.mxu0 0.0
  %1824 = vmatprep.subr.mxu0 0.0
  %1825 = vmatpush1.msra.mxu0 0.0
  %1826 = vmatprep.subr.mxu0 0.0
  %1827 = vmatpush1.msra.mxu0 0.0
  %1828 = vmatprep.subr.mxu0 0.0
  %1829 = vmatpush1.msra.mxu0 0.0
  %1830 = vmatprep.subr.mxu0 0.0
  %1831 = vmatpush1.msra.mxu0 0.0
  %1832 = vmatprep.subr.mxu0 0.0
  %1833 = vmatpush1.msra.mxu0 0.0
  %1834 = vmatprep.subr.mxu0 0.0
  %1835 = vmatpush1.msra.mxu0 0.0
  %1836 = vmatprep.subr.mxu0 0.0
  %1837 = vmatpush1.msra.mxu0 0.0
  %1838 = vmatprep.subr.mxu0 0.0
  %1839 = vmatpush1.msra.mxu0 0.0
  %1840 = vmatprep.subr.mxu0 0.0
  %1841 = vmatpush1.msra.mxu0 0.0
  %1842 = vmatprep.subr.mxu0 0.0
  %1843 = vmatpush1.msra.mxu0 0.0
  %1844 = vmatprep.subr.mxu0 0.0
  %1845 = vmatpush1.msra.mxu0 0.0
  %1846 = vmatprep.subr.mxu0 0.0
  %1847 = vmatpush1.msra.mxu0 0.0
  %1848 = vmatprep.subr.mxu0 0.0
  %1849 = vmatpush1.msra.mxu0 0.0
  %1850 = vmatprep.subr.mxu0 0.0
  %1851 = vmatpush1.msra.mxu0 0.0
  %1852 = vmatprep.subr.mxu0 0.0
  %1853 = vmatpush1.msra.mxu0 0.0
  %1854 = vmatprep.subr.mxu0 0.0
  %1855 = vmatpush1.msra.mxu0 0.0
  %1856 = vmatprep.subr.mxu0 0.0
  %1857 = vmatpush1.msra.mxu0 0.0
  %1858 = vmatprep.subr.mxu0 0.0
  %1859 = vmatpush1.msra.mxu0 0.0
  %1860 = vmatprep.subr.mxu0 0.0
  %1861 = vmatpush1.msra.mxu0 0.0
  %1862 = vmatprep.subr.mxu0 0.0
  %1863 = vmatpush1.msra.mxu0 0.0
  %1864 = vmatprep.subr.mxu0 0.0
  %1865 = vmatpush1.msra.mxu0 0.0
  %1866 = vmatprep.subr.mxu0 0.0
  %1867 = vmatpush1.msra.mxu0 0.0
  %1868 = vmatprep.subr.mxu0 0.0
  %1869 = vmatpush1.msra.mxu0 0.0
  %1870 = vmatprep.mubr.f32.mxu0 0.0
  %1871 = vmatmul.mubr.f32.gmra.mrb[0].mxu0 %v1804
  %v1872 = vpop.f32.mrb[0].mxu0
  %v1873 = vadd.f32 0.0, %v1872
  %v1874 = vpop.f32.mrb[0].mxu0
  %1875 = vdwg.mxu0
  %v1876 = vadd.f32 %v1803, %v1873
  %v1877 = vxor.u32 %v1876, 2147483648
  %v1878 = vmul.f32 %v1877, 1.442695
  %v1879 = vpow.pop %v1878
  %v1880 = vadd.f32 %v1879, 1.0
  %v1881 = vrcp.pop %v1880
  %v1882 = vmul.f32 1.0, %v1881
  %v1883 = vtanh.pop %v1876
  %v1884 = vmul.f32 %v1882, %v1791
  %1886 = vrot.lane.b32.xlu0 %v1883, 64
  %v1887 = vpop.permute.xlu0 %1886
  %v1889 = vmul.f32 %v1882, %v1887
  %1891 = vrot.lane.b32.xlu0 %v1889, 32
  %v1892 = vpop.permute.xlu0 %1891
  %v1894 = vadd.f32 %v1884, %v1892
  %v1895 = vtanh.pop %v1894
  %1897 = vrot.lane.b32.xlu0 %v1895, 64
  %v1898 = vpop.permute.xlu0 %1897
  %v1900 = vmul.f32 %v1882, %v1898
  %1902 = vrot.lane.b32.xlu0 %v1900, 32
  %v1903 = vpop.permute.xlu0 %1902
  %1905 = vst.msk [vmem:[#allocation2 + $0x30] sm:$0xff] %vm54, %v1903
  %v1906 = vld [vmem:[#allocation3 + $0x38] sm:$0xff]
  %v1907 = vsel %vm54, %v1903, 0
  %1909 = vmatprep.subr.mxu0 0.0
  %1910 = vmatpush1.msra.mxu0 %v1183
  %1911 = vmatprep.subr.mxu0 0.0
  %1912 = vmatpush1.msra.mxu0 %v1184
  %1913 = vmatprep.subr.mxu0 0.0
  %1914 = vmatpush1.msra.mxu0 %v1185
  %1915 = vmatprep.subr.mxu0 0.0
  %1916 = vmatpush1.msra.mxu0 %v1186
  %1917 = vmatprep.subr.mxu0 0.0
  %1918 = vmatpush1.msra.mxu0 0.0
  %1919 = vmatprep.subr.mxu0 0.0
  %1920 = vmatpush1.msra.mxu0 0.0
  %1921 = vmatprep.subr.mxu0 0.0
  %1922 = vmatpush1.msra.mxu0 0.0
  %1923 = vmatprep.subr.mxu0 0.0
  %1924 = vmatpush1.msra.mxu0 0.0
  %1925 = vmatprep.subr.mxu0 0.0
  %1926 = vmatpush1.msra.mxu0 0.0
  %1927 = vmatprep.subr.mxu0 0.0
  %1928 = vmatpush1.msra.mxu0 0.0
  %1929 = vmatprep.subr.mxu0 0.0
  %1930 = vmatpush1.msra.mxu0 0.0
  %1931 = vmatprep.subr.mxu0 0.0
  %1932 = vmatpush1.msra.mxu0 0.0
  %1933 = vmatprep.subr.mxu0 0.0
  %1934 = vmatpush1.msra.mxu0 0.0
  %1935 = vmatprep.subr.mxu0 0.0
  %1936 = vmatpush1.msra.mxu0 0.0
  %1937 = vmatprep.subr.mxu0 0.0
  %1938 = vmatpush1.msra.mxu0 0.0
  %1939 = vmatprep.subr.mxu0 0.0
  %1940 = vmatpush1.msra.mxu0 0.0
  %1941 = vmatprep.subr.mxu0 0.0
  %1942 = vmatpush1.msra.mxu0 0.0
  %1943 = vmatprep.subr.mxu0 0.0
  %1944 = vmatpush1.msra.mxu0 0.0
  %1945 = vmatprep.subr.mxu0 0.0
  %1946 = vmatpush1.msra.mxu0 0.0
  %1947 = vmatprep.subr.mxu0 0.0
  %1948 = vmatpush1.msra.mxu0 0.0
  %1949 = vmatprep.subr.mxu0 0.0
  %1950 = vmatpush1.msra.mxu0 0.0
  %1951 = vmatprep.subr.mxu0 0.0
  %1952 = vmatpush1.msra.mxu0 0.0
  %1953 = vmatprep.subr.mxu0 0.0
  %1954 = vmatpush1.msra.mxu0 0.0
  %1955 = vmatprep.subr.mxu0 0.0
  %1956 = vmatpush1.msra.mxu0 0.0
  %1957 = vmatprep.subr.mxu0 0.0
  %1958 = vmatpush1.msra.mxu0 0.0
  %1959 = vmatprep.subr.mxu0 0.0
  %1960 = vmatpush1.msra.mxu0 0.0
  %1961 = vmatprep.subr.mxu0 0.0
  %1962 = vmatpush1.msra.mxu0 0.0
  %1963 = vmatprep.subr.mxu0 0.0
  %1964 = vmatpush1.msra.mxu0 0.0
  %1965 = vmatprep.subr.mxu0 0.0
  %1966 = vmatpush1.msra.mxu0 0.0
  %1967 = vmatprep.subr.mxu0 0.0
  %1968 = vmatpush1.msra.mxu0 0.0
  %1969 = vmatprep.subr.mxu0 0.0
  %1970 = vmatpush1.msra.mxu0 0.0
  %1971 = vmatprep.subr.mxu0 0.0
  %1972 = vmatpush1.msra.mxu0 0.0
  %1973 = vmatprep.mubr.f32.mxu0 0.0
  %1974 = vmatmul.mubr.f32.gmra.mrb[0].mxu0 %v1907
  %v1975 = vpop.f32.mrb[0].mxu0
  %v1976 = vadd.f32 0.0, %v1975
  %v1977 = vpop.f32.mrb[0].mxu0
  %1978 = vdwg.mxu0
  %v1979 = vadd.f32 %v1906, %v1976
  %v1980 = vxor.u32 %v1979, 2147483648
  %v1981 = vmul.f32 %v1980, 1.442695
  %v1982 = vpow.pop %v1981
  %v1983 = vadd.f32 %v1982, 1.0
  %v1984 = vrcp.pop %v1983
  %v1985 = vmul.f32 1.0, %v1984
  %v1986 = vtanh.pop %v1979
  %v1987 = vmul.f32 %v1985, %v1894
  %1989 = vrot.lane.b32.xlu0 %v1986, 64
  %v1990 = vpop.permute.xlu0 %1989
  %v1992 = vmul.f32 %v1985, %v1990
  %1994 = vrot.lane.b32.xlu0 %v1992, 32
  %v1995 = vpop.permute.xlu0 %1994
  %v1997 = vadd.f32 %v1987, %v1995
  %v1998 = vtanh.pop %v1997
  %2000 = vrot.lane.b32.xlu0 %v1998, 64
  %v2001 = vpop.permute.xlu0 %2000
  %v2003 = vmul.f32 %v1985, %v2001
  %2005 = vrot.lane.b32.xlu0 %v2003, 32
  %v2006 = vpop.permute.xlu0 %2005
  %2008 = vst.msk [vmem:[#allocation2 + $0x38] sm:$0xff] %vm54, %v2006
  %s2009 = scalar_lea.vmem %s10, 8
  %2010 = vst.msk [vmem:[%s2009] sm:$0xff] %vm54, %v2006
  %2012 = vrot.lane.b32.xlu0 %v1997, 96
  %v2013 = vpop.permute.xlu0 %2012
  %s2015 = scalar_lea.vmem %s11, 8
  %2016 = vst.msk [vmem:[%s2015] sm:$0xff] %vm54, %v2013
  %v2017 = vld [vmem:[#allocation2] sm:$0xff]
  %v2018 = vld [vmem:[#allocation2 + $0x8] sm:$0xff]
  %v2019 = vld [vmem:[#allocation2 + $0x10] sm:$0xff]
  %v2020 = vld [vmem:[#allocation2 + $0x18] sm:$0xff]
  %v2021 = vld [vmem:[#allocation2 + $0x20] sm:$0xff]
  %v2022 = vld [vmem:[#allocation2 + $0x28] sm:$0xff]
  %v2023 = vld [vmem:[#allocation2 + $0x30] sm:$0xff]
  %v2024 = vld [vmem:[#allocation2 + $0x38] sm:$0xff]
  %v2025 = vld [vmem:[%s7] sm:$0xff]
  %v2026 = vld [vmem:[%s7 + $0x8] sm:$0xff]
  %v2027 = vld [vmem:[%s7 + $0x10] sm:$0xff]
  %v2028 = vld [vmem:[%s7 + $0x18] sm:$0xff]
  %v2029 = vld [vmem:[%s8] sm:$0x1]
  %v2031 = vlaneseq
  %v2032 = vshrl.u32 %v2031, 7
  %v2033 = vsub.s32 0, %v2032
  %v2034 = vrot.slane %v2029, %v2033
  %v2037 = vsel %vm54, %v2017, 0
  %v2040 = vsel %vm54, %v2018, 0
  %v2043 = vsel %vm54, %v2019, 0
  %v2046 = vsel %vm54, %v2020, 0
  %v2049 = vsel %vm54, %v2021, 0
  %v2052 = vsel %vm54, %v2022, 0
  %v2055 = vsel %vm54, %v2023, 0
  %v2058 = vsel %vm54, %v2024, 0
  %2060 = vmatprep.subr.mxu0 0.0
  %2061 = vmatpush1.msra.mxu0 %v2025
  %2062 = vmatprep.subr.mxu0 0.0
  %2063 = vmatpush1.msra.mxu0 %v2026
  %2064 = vmatprep.subr.mxu0 0.0
  %2065 = vmatpush1.msra.mxu0 %v2027
  %2066 = vmatprep.subr.mxu0 0.0
  %2067 = vmatpush1.msra.mxu0 %v2028
  %2068 = vmatprep.subr.mxu0 0.0
  %2069 = vmatpush1.msra.mxu0 0.0
  %2070 = vmatprep.subr.mxu0 0.0
  %2071 = vmatpush1.msra.mxu0 0.0
  %2072 = vmatprep.subr.mxu0 0.0
  %2073 = vmatpush1.msra.mxu0 0.0
  %2074 = vmatprep.subr.mxu0 0.0
  %2075 = vmatpush1.msra.mxu0 0.0
  %2076 = vmatprep.subr.mxu0 0.0
  %2077 = vmatpush1.msra.mxu0 0.0
  %2078 = vmatprep.subr.mxu0 0.0
  %2079 = vmatpush1.msra.mxu0 0.0
  %2080 = vmatprep.subr.mxu0 0.0
  %2081 = vmatpush1.msra.mxu0 0.0
  %2082 = vmatprep.subr.mxu0 0.0
  %2083 = vmatpush1.msra.mxu0 0.0
  %2084 = vmatprep.subr.mxu0 0.0
  %2085 = vmatpush1.msra.mxu0 0.0
  %2086 = vmatprep.subr.mxu0 0.0
  %2087 = vmatpush1.msra.mxu0 0.0
  %2088 = vmatprep.subr.mxu0 0.0
  %2089 = vmatpush1.msra.mxu0 0.0
  %2090 = vmatprep.subr.mxu0 0.0
  %2091 = vmatpush1.msra.mxu0 0.0
  %2092 = vmatprep.subr.mxu0 0.0
  %2093 = vmatpush1.msra.mxu0 0.0
  %2094 = vmatprep.subr.mxu0 0.0
  %2095 = vmatpush1.msra.mxu0 0.0
  %2096 = vmatprep.subr.mxu0 0.0
  %2097 = vmatpush1.msra.mxu0 0.0
  %2098 = vmatprep.subr.mxu0 0.0
  %2099 = vmatpush1.msra.mxu0 0.0
  %2100 = vmatprep.subr.mxu0 0.0
  %2101 = vmatpush1.msra.mxu0 0.0
  %2102 = vmatprep.subr.mxu0 0.0
  %2103 = vmatpush1.msra.mxu0 0.0
  %2104 = vmatprep.subr.mxu0 0.0
  %2105 = vmatpush1.msra.mxu0 0.0
  %2106 = vmatprep.subr.mxu0 0.0
  %2107 = vmatpush1.msra.mxu0 0.0
  %2108 = vmatprep.subr.mxu0 0.0
  %2109 = vmatpush1.msra.mxu0 0.0
  %2110 = vmatprep.subr.mxu0 0.0
  %2111 = vmatpush1.msra.mxu0 0.0
  %2112 = vmatprep.subr.mxu0 0.0
  %2113 = vmatpush1.msra.mxu0 0.0
  %2114 = vmatprep.subr.mxu0 0.0
  %2115 = vmatpush1.msra.mxu0 0.0
  %2116 = vmatprep.subr.mxu0 0.0
  %2117 = vmatpush1.msra.mxu0 0.0
  %2118 = vmatprep.subr.mxu0 0.0
  %2119 = vmatpush1.msra.mxu0 0.0
  %2120 = vmatprep.subr.mxu0 0.0
  %2121 = vmatpush1.msra.mxu0 0.0
  %2122 = vmatprep.subr.mxu0 0.0
  %2123 = vmatpush1.msra.mxu0 0.0
  %2124 = vmatprep.mubr.f32.mxu0 0.0
  %2125 = vmatmul.mubr.f32.gmra.mrb[0].mxu0 %v2037
  %v2126 = vpop.f32.mrb[0].mxu0
  %v2127 = vadd.f32 %v2034, %v2126
  %v2128 = vpop.f32.mrb[0].mxu0
  %2129 = vmatprep.mubr.f32.mxu0 0.0
  %2130 = vmatmul.mubr.f32.gmra.mrb[0].mxu0 %v2040
  %v2131 = vpop.f32.mrb[0].mxu0
  %v2132 = vadd.f32 %v2034, %v2131
  %v2133 = vpop.f32.mrb[0].mxu0
  %2134 = vmatprep.mubr.f32.mxu0 0.0
  %2135 = vmatmul.mubr.f32.gmra.mrb[0].mxu0 %v2043
  %v2136 = vpop.f32.mrb[0].mxu0
  %v2137 = vadd.f32 %v2034, %v2136
  %v2138 = vpop.f32.mrb[0].mxu0
  %2139 = vmatprep.mubr.f32.mxu0 0.0
  %2140 = vmatmul.mubr.f32.gmra.mrb[0].mxu0 %v2046
  %v2141 = vpop.f32.mrb[0].mxu0
  %v2142 = vadd.f32 %v2034, %v2141
  %v2143 = vpop.f32.mrb[0].mxu0
  %2144 = vmatprep.mubr.f32.mxu0 0.0
  %2145 = vmatmul.mubr.f32.gmra.mrb[0].mxu0 %v2049
  %v2146 = vpop.f32.mrb[0].mxu0
  %v2147 = vadd.f32 %v2034, %v2146
  %v2148 = vpop.f32.mrb[0].mxu0
  %2149 = vmatprep.mubr.f32.mxu0 0.0
  %2150 = vmatmul.mubr.f32.gmra.mrb[0].mxu0 %v2052
  %v2151 = vpop.f32.mrb[0].mxu0
  %v2152 = vadd.f32 %v2034, %v2151
  %v2153 = vpop.f32.mrb[0].mxu0
  %2154 = vmatprep.mubr.f32.mxu0 0.0
  %2155 = vmatmul.mubr.f32.gmra.mrb[0].mxu0 %v2055
  %v2156 = vpop.f32.mrb[0].mxu0
  %v2157 = vadd.f32 %v2034, %v2156
  %v2158 = vpop.f32.mrb[0].mxu0
  %2159 = vmatprep.mubr.f32.mxu0 0.0
  %2160 = vmatmul.mubr.f32.gmra.mrb[0].mxu0 %v2058
  %v2161 = vpop.f32.mrb[0].mxu0
  %v2162 = vadd.f32 %v2034, %v2161
  %v2163 = vpop.f32.mrb[0].mxu0
  %2164 = vdwg.mxu0
  %2165 = vst [vmem:[%s9] sm:$0xff] %v2127
  %2166 = vst [vmem:[%s9 + $0x8] sm:$0xff] %v2132
  %2167 = vst [vmem:[%s9 + $0x10] sm:$0xff] %v2137
  %2168 = vst [vmem:[%s9 + $0x18] sm:$0xff] %v2142
  %2169 = vst [vmem:[%s9 + $0x20] sm:$0xff] %v2147
  %2170 = vst [vmem:[%s9 + $0x28] sm:$0xff] %v2152
  %2171 = vst [vmem:[%s9 + $0x30] sm:$0xff] %v2157
  %2172 = vst [vmem:[%s9 + $0x38] sm:$0xff] %v2162
  // Predicated region
  $region38: #{lstm_net_forward.1} parent=0 // pred_check
    _
  $region39: #{lstm_net_forward.1} parent=0 // pred_check_branch
    %2174 = sbr.rel (0) target = $region41
  $region40: #{lstm_net_forward.1} parent=0 // pred_region
    _
  $region41: #{lstm_net_forward.1} parent=0 // pred_fallthru
    _
  // Predicated region
  $region42: #{lstm_net_forward.1} parent=0 // pred_check
    _
  $region43: #{lstm_net_forward.1} parent=0 // pred_check_branch
    %2176 = sbr.rel (0) target = $region45
  $region44: #{lstm_net_forward.1} parent=0 // pred_region
    _
  $region45: #{lstm_net_forward.1} parent=0 // pred_fallthru
    _
  // Predicated region
  $region46: #{lstm_net_forward.1} parent=0 // pred_check
    _
  $region47: #{lstm_net_forward.1} parent=0 // pred_check_branch
    %2178 = sbr.rel (0) target = $region49
  $region48: #{lstm_net_forward.1} parent=0 // pred_region
    _
  $region49: #{lstm_net_forward.1} parent=0 // pred_fallthru
    _
  // Predicated region
  $region50: #{lstm_net_forward.1} parent=0 // pred_check
    _
  $region51: #{lstm_net_forward.1} parent=0 // pred_check_branch
    %2180 = sbr.rel (0) target = $region53
  $region52: #{lstm_net_forward.1} parent=0 // pred_region
    _
  $region53: #{lstm_net_forward.1} parent=0 // pred_fallthru
    _
  // Predicated region
  $region54: #{lstm_net_forward.1} parent=0 // pred_check
    _
  $region55: #{lstm_net_forward.1} parent=0 // pred_check_branch
    %2182 = sbr.rel (0) target = $region57
  $region56: #{lstm_net_forward.1} parent=0 // pred_region
    _
  $region57: #{lstm_net_forward.1} parent=0 // pred_fallthru
    _
  // Predicated region
  $region58: #{lstm_net_forward.1} parent=0 // pred_check
    _
  $region59: #{lstm_net_forward.1} parent=0 // pred_check_branch
    %2184 = sbr.rel (0) target = $region61
  $region60: #{lstm_net_forward.1} parent=0 // pred_region
    _
  $region61: #{lstm_net_forward.1} parent=0 // pred_fallthru
    _

</llo_original>
